<compile_context>
chip_gen: v7x
topology: tpu7x:2x2x1
jax: 0.10.0
libtpu: 0.0.40
codegen_flags: <defaults>
</compile_context>

<pallas_src>
import functools

import jax
import jax.numpy as jnp
from jax import lax
from jax.experimental import pallas as pl
from jax.experimental.pallas import tpu as pltpu

LANE = 128
_TARGET_DEPTH = 256     # target contraction depth per MXU dot


def _round_up(x, m):
    return (x + m - 1) // m * m


def _vmem_capacity_bytes():
    try:
        return int(pltpu.get_tpu_info().vmem_capacity_bytes)
    except Exception:
        return 64 * 1024 * 1024          # conservative (v7x-sized) fallback


def _est_step_vmem(S, C_in_g, C_out_g, n_chunks, Qc, TL, halo, out_itemsize):
    """Rough per-grid-step VMEM working set (double-buffered blocks + temporaries)."""
    bf16 = 2
    depth = Qc * S * C_in_g
    blocks = 2 * (S * C_in_g * (TL + halo) * bf16      # main + halo input blocks
                  + n_chunks * C_out_g * depth * bf16  # folded weights
                  + C_out_g * TL * out_itemsize        # output tile
                  + C_out_g * 4)                       # bias
    temps = (S * C_in_g * (TL + halo) * bf16           # main‖halo join
             + C_out_g * TL * 4                        # f32 accumulator
             + depth * TL * bf16                       # chunk RHS / shifted slice
             + S * C_in_g * TL * bf16)                 # one extra live slice
    return blocks + temps


def _conv1d_kernel(xm_ref, xh_ref, w_ref, b_ref, o_ref, *,
                   TL, Qc, n_chunks, n_shifts, L_out, mask_tail, slope):
    # xm_ref: (1, 1, S*Cg, TL)                 main input tile (bf16), stride-decomposed
    # xh_ref: (1, 1, S*Cg, HALO)               right halo (2nd view of the same array)
    # w_ref : (1, n_chunks, C_out_g, Qc*S*Cg)  chunk-folded weights (bf16, zero-padded taps)
    # b_ref : (1, C_out_g, 1)                  bias (f32)
    # o_ref : (1, 1, C_out_g, TL)              output tile
    xm = xm_ref[0, 0]                                        # (S*Cg, TL)
    if n_shifts > 1:
        x = jnp.concatenate([xm, xh_ref[0, 0]], axis=-1)     # (S*Cg, TL + HALO)
    else:
        x = xm

    def shifted(q):                                          # q is a static Python int
        return xm if q == 0 else x[:, q:q + TL]

    def chunk_rhs(j):
        if Qc == 1:
            return shifted(j)
        return jnp.concatenate([shifted(j * Qc + i) for i in range(Qc)], axis=0)

    # Accumulate the conv as n_chunks deep-contraction bf16 MXU dots (f32 accumulate).
    acc = jnp.dot(w_ref[0, 0], chunk_rhs(0), preferred_element_type=jnp.float32)
    for j in range(1, n_chunks):                             # static unroll
        acc = acc + jnp.dot(w_ref[0, j], chunk_rhs(j),
                            preferred_element_type=jnp.float32)

    y = acc + b_ref[0]                                       # (C_out_g, TL)
    if slope is not None:                                    # leaky_relu, slope in [0,1]
        y = jnp.maximum(y, slope * y)
    if mask_tail:
        # Zero the padded tail so it doubles as the next layer's zero right-padding.
        col = pl.program_id(2) * TL + lax.broadcasted_iota(jnp.int32, (1, TL), 1)
        y = jnp.where(col < L_out, y, 0.0)
    o_ref[0, 0] = y.astype(o_ref.dtype)


def conv1d_pallas(x, valid_len, w, b, *, stride, padding, groups,
                  lrelu_slope=None, out_dtype=jnp.bfloat16):
    """Grouped Conv1d (torch.nn.Conv1d semantics, NCL layout) + optional leaky relu.

    `x` may be wider than `valid_len`; columns >= valid_len must be zero (this is
    guaranteed for outputs of this function).  Returns (y, L_out) where `y` has
    shape (N, C_out, L_pad >= L_out) with zeros in columns >= L_out.
    """
    N, C_in, L_av = x.shape
    C_out, C_in_g, K = w.shape
    G, S = groups, stride
    assert C_in == G * C_in_g and C_out % G == 0
    assert lrelu_slope is None or 0.0 <= lrelu_slope <= 1.0
    C_out_g = C_out // G
    L_out = (valid_len + 2 * padding - K) // S + 1

    # Tap k = q*S + r reads decomposed row-block r at lane shift q.  Chunk the Q
    # shifts so each MXU dot has contraction depth ~_TARGET_DEPTH.
    Q = (K - 1) // S + 1                      # number of distinct lane shifts
    depth1 = S * C_in_g                       # contraction depth per shift
    Qc = max(1, min(Q, -(-_TARGET_DEPTH // depth1)))
    n_chunks = -(-Q // Qc)
    QP = n_chunks * Qc                        # shifts incl. zero-weight padding
    halo = _round_up(max(QP - 1, 1), LANE)    # right halo width (2nd view of x_dec)

    # Output tiling / VMEM budget per generation (v5e/v6e: 128 MiB, v7x: 64 MiB).
    cap = _vmem_capacity_bytes()
    budget = int(0.75 * cap)
    candidates = (1024, 512) if cap >= (96 << 20) else (512,)
    out_isz = jnp.dtype(out_dtype).itemsize
    TL = _round_up(min(L_out, candidates[-1]), LANE)
    for lt in candidates:
        TL = _round_up(min(L_out, lt), LANE)
        if 2 * _est_step_vmem(S, C_in_g, C_out_g, n_chunks, Qc, TL, halo, out_isz) <= budget:
            break
    assert TL % halo == 0 and halo >= QP - 1
    T = pl.cdiv(L_out, TL)
    L_pad = T * TL
    est = _est_step_vmem(S, C_in_g, C_out_g, n_chunks, Qc, TL, halo, out_isz)
    vmem_limit = int(min(budget, max(32 << 20, 2 * est)))

    # Single zero-pad pass so decomposed column m, row r holds padded-input
    # position m*S + r; width covers all main tiles plus one halo block.
    width = L_pad + halo
    need = width * S
    right = need - padding - L_av
    if right >= 0:
        x_p = jnp.pad(x, ((0, 0), (0, 0), (padding, right)))
    else:
        x_p = jnp.pad(x, ((0, 0), (0, 0), (padding, 0)))[..., :need]
    x_p = x_p.astype(jnp.bfloat16)            # no-op for layers >= 2 (already bf16)
    if S == 1:
        x_dec = x_p.reshape(N, G, C_in_g, width)
    else:
        # TODO(synk): fold this transpose into the kernel via strided-lane tap
        # addressing (or emit the previous layer directly in this layout).
        x_dec = (x_p.reshape(N, G, C_in_g, width, S)
                 .transpose(0, 1, 4, 2, 3)
                 .reshape(N, G, S * C_in_g, width))

    # Fold taps into per-chunk weight mats; contraction rows ordered (shift, r, c)
    # to match the kernel's RHS layout.  Taps >= K get zero weights.
    w_g = w.reshape(G, C_out_g, C_in_g, K)
    if QP * S > K:
        w_g = jnp.pad(w_g, ((0, 0), (0, 0), (0, 0), (0, QP * S - K)))
    w_fold = (w_g.reshape(G, C_out_g, C_in_g, n_chunks, Qc, S)
              .transpose(0, 3, 1, 4, 5, 2)
              .reshape(G, n_chunks, C_out_g, Qc * S * C_in_g)
              .astype(jnp.bfloat16))
    b_g = b.reshape(G, C_out_g, 1).astype(jnp.float32)

    kernel = functools.partial(
        _conv1d_kernel, TL=TL, Qc=Qc, n_chunks=n_chunks, n_shifts=QP,
        L_out=L_out, mask_tail=(L_pad > L_out), slope=lrelu_slope)

    out = pl.pallas_call(
        kernel,
        out_shape=jax.ShapeDtypeStruct((N, G, C_out_g, L_pad), out_dtype),
        grid=(G, N, T),
        in_specs=[
            # main tile
            pl.BlockSpec((1, 1, S * C_in_g, TL), lambda g, n, t: (n, g, 0, t)),
            # right halo: lane-aligned 128-wide view of the SAME array
            pl.BlockSpec((1, 1, S * C_in_g, halo),
                         lambda g, n, t: (n, g, 0, (t + 1) * (TL // halo))),
            # chunk-folded weights (resident per group along the inner N, T sweep)
            pl.BlockSpec((1, n_chunks, C_out_g, Qc * S * C_in_g),
                         lambda g, n, t: (g, 0, 0, 0)),
            pl.BlockSpec((1, C_out_g, 1), lambda g, n, t: (g, 0, 0)),
        ],
        out_specs=pl.BlockSpec((1, 1, C_out_g, TL), lambda g, n, t: (n, g, 0, t)),
        compiler_params=pltpu.CompilerParams(
            dimension_semantics=("parallel", "parallel", "parallel"),
            vmem_limit_bytes=vmem_limit),
    )(x_dec, x_dec, w_fold, b_g)

    return out.reshape(N, C_out, L_pad), L_out


def init_params(key, channels, kernel_sizes, strides, groups):
    params = []
    for i in range(len(channels) - 1):
        key, k1, k2 = jax.random.split(key, 3)
        c_in, c_out, ks, g = channels[i], channels[i + 1], kernel_sizes[i], groups[i]
        w = 0.1 * jax.random.normal(k1, (c_out, c_in // g, ks), jnp.float32)
        b = 0.01 * jax.random.normal(k2, (c_out,), jnp.float32)
        params.append((w, b))
    key, k1, k2 = jax.random.split(key, 3)
    w = 0.1 * jax.random.normal(k1, (1, channels[-1], 3), jnp.float32)
    b = 0.01 * jax.random.normal(k2, (1,), jnp.float32)
    params.append((w, b))  # out_conv
    return params


def scale_discriminator_forward(x, params, kernel_sizes, strides, groups,
                                lrelu_slope=0.1):
    # TODO(synk): fuse the first (C_in=1, MXU-starved) conv into layer 2 and the
    # final C_out=1 conv into the previous layer's epilogue to save two full-L
    # HBM round trips; also carry the stride-decomposed layout between layers.
    feature_map = []
    N = x.shape[0]
    valid = x.shape[-1]
    for i, (w, b) in enumerate(params[:-1]):
        x, valid = conv1d_pallas(x, valid, w, b, stride=strides[i],
                                 padding=kernel_sizes[i] // 2, groups=groups[i],
                                 lrelu_slope=lrelu_slope, out_dtype=jnp.bfloat16)
        feature_map.append(x[..., :valid])            # bf16 feature maps
    w, b = params[-1]
    x, valid = conv1d_pallas(x, valid, w, b, stride=1, padding=1, groups=1,
                             lrelu_slope=None, out_dtype=jnp.float32)
    x = x[..., :valid]
    feature_map.append(x)
    return x.reshape(N, -1), feature_map


# ----------------------- pure-JAX reference for validation -----------------------
def _ref_conv1d(x, w, b, stride, padding, groups):
    y = lax.conv_general_dilated(
        x, w, window_strides=(stride,), padding=[(padding, padding)],
        dimension_numbers=("NCH", "OIH", "NCH"), feature_group_count=groups)
    return y + b[None, :, None]


def reference_forward(x, params, kernel_sizes, strides, groups, lrelu_slope=0.1):
    feature_map = []
    for i, (w, b) in enumerate(params[:-1]):
        x = _ref_conv1d(x, w, b, strides[i], kernel_sizes[i] // 2, groups[i])
        x = jnp.where(x >= 0, x, lrelu_slope * x)
        feature_map.append(x)
    w, b = params[-1]
    x = _ref_conv1d(x, w, b, 1, 1, 1)
    feature_map.append(x)
    return x.reshape(x.shape[0], -1), feature_map


if __name__ == "__main__":
    # Small config consistent with the module's constructor arguments.
    channels = [1, 4, 8, 8]
    kernel_sizes = [5, 5, 3]
    strides = [1, 2, 1]
    groups = [1, 2, 2]

    key = jax.random.PRNGKey(0)
    kp, kx = jax.random.split(key)
    params = init_params(kp, channels, kernel_sizes, strides, groups)
    x = jax.random.normal(kx, (2, 1, 64), jnp.float32)   # (batch, channels=1, seq)

    @jax.jit
    def fwd(x, params):
        return scale_discriminator_forward(x, params, kernel_sizes, strides, groups)

    out, fmap = fwd(x, params)
    out = jax.block_until_ready(out)
    fmap = [jax.block_until_ready(f) for f in fmap]

    out_ref, fmap_ref = reference_forward(x, params, kernel_sizes, strides, groups)

    assert out.shape == (2, 32), out.shape
    assert len(fmap) == len(fmap_ref) == 4
    # bf16 matmul operands + bf16 intermediate activations (f32 accumulation)
    # -> loosened tolerances; error compounds over the layer stack.
    for a, r in zip(fmap, fmap_ref):
        assert a.shape == r.shape
        assert jnp.allclose(a.astype(jnp.float32), r, atol=3e-2, rtol=3e-2)
    assert jnp.allclose(out, out_ref, atol=3e-2, rtol=3e-2)

    print("KERNEL_OK")
</pallas_src>

<mosaic_0001>
module attributes {stable_mosaic.version = 11 : i64} {
  func.func @_conv1d_kernel(%arg0: i32, %arg1: i32, %arg2: i32, %arg3: memref<1x1x1x128xbf16, #tpu.memory_space<vmem>>, %arg4: memref<1x1x1x128xbf16, #tpu.memory_space<vmem>>, %arg5: memref<1x1x4x5xbf16, #tpu.memory_space<vmem>>, %arg6: memref<1x4x1xf32, #tpu.memory_space<vmem>>, %arg7: memref<1x1x4x128xbf16, #tpu.memory_space<vmem>>) attributes {dimension_semantics = [#tpu.dimension_semantics<parallel>, #tpu.dimension_semantics<parallel>, #tpu.dimension_semantics<parallel>], iteration_bounds = array<i64: 1, 2, 1>, scalar_prefetch = 0 : i64, scratch_operands = 0 : i64, tpu.core_type = #tpu.core_type<tc>, window_params = [{transform_indices = @transform_0, window_bounds = array<i64: 1, 1, 1, 128>}, {transform_indices = @transform_1, window_bounds = array<i64: 1, 1, 1, 128>}, {transform_indices = @transform_2, window_bounds = array<i64: 1, 1, 4, 5>}, {transform_indices = @transform_3, window_bounds = array<i64: 1, 4, 1>}, {transform_indices = @transform_4, window_bounds = array<i64: 1, 1, 4, 128>}]} {
    %c0 = arith.constant 0 : index
    %c0_0 = arith.constant 0 : index
    %c0_1 = arith.constant 0 : index
    %c0_2 = arith.constant 0 : index
    %0 = vector.load %arg3[%c0, %c0_0, %c0_1, %c0_2] : memref<1x1x1x128xbf16, #tpu.memory_space<vmem>>, vector<1x1x1x128xbf16>
    %1 = vector.shape_cast %0 : vector<1x1x1x128xbf16> to vector<1x128xbf16>
    %c0_3 = arith.constant 0 : index
    %c0_4 = arith.constant 0 : index
    %c0_5 = arith.constant 0 : index
    %c0_6 = arith.constant 0 : index
    %2 = vector.load %arg4[%c0_3, %c0_4, %c0_5, %c0_6] : memref<1x1x1x128xbf16, #tpu.memory_space<vmem>>, vector<1x1x1x128xbf16>
    %3 = vector.shape_cast %2 : vector<1x1x1x128xbf16> to vector<1x128xbf16>
    %4 = tpu.concatenate %1, %3 in 1 : vector<1x128xbf16>, vector<1x128xbf16> -> vector<1x256xbf16>
    %c0_7 = arith.constant 0 : index
    %c0_8 = arith.constant 0 : index
    %c0_9 = arith.constant 0 : index
    %c0_10 = arith.constant 0 : index
    %5 = vector.load %arg5[%c0_7, %c0_8, %c0_9, %c0_10] : memref<1x1x4x5xbf16, #tpu.memory_space<vmem>>, vector<1x1x4x5xbf16>
    %6 = vector.shape_cast %5 : vector<1x1x4x5xbf16> to vector<4x5xbf16>
    %7 = vector.extract_strided_slice %4 {offsets = [0, 1], sizes = [1, 128], strides = [1, 1]} : vector<1x256xbf16> to vector<1x128xbf16>
    %8 = vector.extract_strided_slice %4 {offsets = [0, 2], sizes = [1, 128], strides = [1, 1]} : vector<1x256xbf16> to vector<1x128xbf16>
    %9 = vector.extract_strided_slice %4 {offsets = [0, 3], sizes = [1, 128], strides = [1, 1]} : vector<1x256xbf16> to vector<1x128xbf16>
    %10 = vector.extract_strided_slice %4 {offsets = [0, 4], sizes = [1, 128], strides = [1, 1]} : vector<1x256xbf16> to vector<1x128xbf16>
    %11 = tpu.concatenate %1, %7, %8, %9, %10 in 0 : vector<1x128xbf16>, vector<1x128xbf16>, vector<1x128xbf16>, vector<1x128xbf16>, vector<1x128xbf16> -> vector<5x128xbf16>
    %cst = arith.constant dense<0.000000e+00> : vector<4x128xf32>
    %12 = tpu.matmul %6, %11, %cst {dimension_numbers = #tpu.dot_dimension_numbers<[1], [0], [0], [1], [0, 0, 1, 1], [], []>} : vector<4x5xbf16>, vector<5x128xbf16>, vector<4x128xf32> -> vector<4x128xf32>
    %c0_11 = arith.constant 0 : index
    %c0_12 = arith.constant 0 : index
    %c0_13 = arith.constant 0 : index
    %13 = vector.load %arg6[%c0_11, %c0_12, %c0_13] : memref<1x4x1xf32, #tpu.memory_space<vmem>>, vector<1x4x1xf32>
    %14 = vector.shape_cast %13 : vector<1x4x1xf32> to vector<4x1xf32>
    %15 = vector.broadcast %14 : vector<4x1xf32> to vector<4x128xf32>
    %16 = arith.addf %12, %15 : vector<4x128xf32>
    %cst_14 = arith.constant 1.000000e-01 : f32
    %17 = vector.broadcast %cst_14 : f32 to vector<4x128xf32>
    %18 = arith.mulf %17, %16 : vector<4x128xf32>
    %19 = arith.maximumf %16, %18 : vector<4x128xf32>
    %c128_i32 = arith.constant 128 : i32
    %20 = arith.muli %arg2, %c128_i32 : i32
    %21 = tpu.iota {dimensions = array<i32: 1>} : vector<1x128xi32>
    %22 = vector.broadcast %20 : i32 to vector<1x128xi32>
    %23 = arith.addi %22, %21 : vector<1x128xi32>
    %c64_i32 = arith.constant 64 : i32
    %24 = vector.broadcast %c64_i32 : i32 to vector<1x128xi32>
    %25 = arith.cmpi slt, %23, %24 : vector<1x128xi32>
    %cst_15 = arith.constant 0.000000e+00 : f32
    %26 = vector.shape_cast %25 : vector<1x128xi1> to vector<1x128xi1>
    %27 = vector.broadcast %26 : vector<1x128xi1> to vector<4x128xi1>
    %28 = vector.broadcast %cst_15 : f32 to vector<4x128xf32>
    %29 = arith.select %27, %19, %28 : vector<4x128xi1>, vector<4x128xf32>
    %30 = arith.truncf %29 : vector<4x128xf32> to vector<4x128xbf16>
    %c0_16 = arith.constant 0 : index
    %c0_17 = arith.constant 0 : index
    %c0_18 = arith.constant 0 : index
    %c0_19 = arith.constant 0 : index
    %31 = vector.load %arg7[%c0_16, %c0_17, %c0_18, %c0_19] : memref<1x1x4x128xbf16, #tpu.memory_space<vmem>>, vector<1x1x4x128xbf16>
    %32 = vector.shape_cast %31 : vector<1x1x4x128xbf16> to vector<4x128xbf16>
    %33 = vector.shape_cast %30 : vector<4x128xbf16> to vector<1x1x4x128xbf16>
    tpu.vector_store %arg7[%c0_16, %c0_17, %c0_18, %c0_19], %33 {strides = array<i32>} : memref<1x1x4x128xbf16, #tpu.memory_space<vmem>>, vector<1x1x4x128xbf16>,
    return
  }
  func.func @transform_0(%arg0: i32, %arg1: i32, %arg2: i32) -> (i32, i32, i32, i32) {
    %c0_i32 = arith.constant 0 : i32
    %c0_i32_0 = arith.constant 0 : i32
    return %arg1, %arg0, %c0_i32, %arg2 : i32, i32, i32, i32
  }
  func.func @transform_1(%arg0: i32, %arg1: i32, %arg2: i32) -> (i32, i32, i32, i32) {
    %c1_i32 = arith.constant 1 : i32
    %0 = arith.addi %arg2, %c1_i32 : i32
    %c1_i32_0 = arith.constant 1 : i32
    %1 = arith.muli %0, %c1_i32_0 : i32
    %c0_i32 = arith.constant 0 : i32
    %c0_i32_1 = arith.constant 0 : i32
    return %arg1, %arg0, %c0_i32, %1 : i32, i32, i32, i32
  }
  func.func @transform_2(%arg0: i32, %arg1: i32, %arg2: i32) -> (i32, i32, i32, i32) {
    %c0_i32 = arith.constant 0 : i32
    %c0_i32_0 = arith.constant 0 : i32
    %c0_i32_1 = arith.constant 0 : i32
    %c0_i32_2 = arith.constant 0 : i32
    return %arg0, %c0_i32, %c0_i32_0, %c0_i32_1 : i32, i32, i32, i32
  }
  func.func @transform_3(%arg0: i32, %arg1: i32, %arg2: i32) -> (i32, i32, i32) {
    %c0_i32 = arith.constant 0 : i32
    %c0_i32_0 = arith.constant 0 : i32
    %c0_i32_1 = arith.constant 0 : i32
    return %arg0, %c0_i32, %c0_i32_0 : i32, i32, i32
  }
  func.func @transform_4(%arg0: i32, %arg1: i32, %arg2: i32) -> (i32, i32, i32, i32) {
    %c0_i32 = arith.constant 0 : i32
    %c0_i32_0 = arith.constant 0 : i32
    return %arg1, %arg0, %c0_i32, %arg2 : i32, i32, i32, i32
  }
}

module attributes {stable_mosaic.version = 11 : i64} {
  func.func @_conv1d_kernel(%arg0: i32, %arg1: i32, %arg2: i32, %arg3: memref<1x1x4x128xbf16, #tpu.memory_space<vmem>>, %arg4: memref<1x1x4x128xbf16, #tpu.memory_space<vmem>>, %arg5: memref<1x1x4x12xbf16, #tpu.memory_space<vmem>>, %arg6: memref<1x4x1xf32, #tpu.memory_space<vmem>>, %arg7: memref<1x1x4x128xbf16, #tpu.memory_space<vmem>>) attributes {dimension_semantics = [#tpu.dimension_semantics<parallel>, #tpu.dimension_semantics<parallel>, #tpu.dimension_semantics<parallel>], iteration_bounds = array<i64: 2, 2, 1>, scalar_prefetch = 0 : i64, scratch_operands = 0 : i64, tpu.core_type = #tpu.core_type<tc>, window_params = [{transform_indices = @transform_0, window_bounds = array<i64: 1, 1, 4, 128>}, {transform_indices = @transform_1, window_bounds = array<i64: 1, 1, 4, 128>}, {transform_indices = @transform_2, window_bounds = array<i64: 1, 1, 4, 12>}, {transform_indices = @transform_3, window_bounds = array<i64: 1, 4, 1>}, {transform_indices = @transform_4, window_bounds = array<i64: 1, 1, 4, 128>}]} {
    %c0 = arith.constant 0 : index
    %c0_0 = arith.constant 0 : index
    %c0_1 = arith.constant 0 : index
    %c0_2 = arith.constant 0 : index
    %0 = vector.load %arg3[%c0, %c0_0, %c0_1, %c0_2] : memref<1x1x4x128xbf16, #tpu.memory_space<vmem>>, vector<1x1x4x128xbf16>
    %1 = vector.shape_cast %0 : vector<1x1x4x128xbf16> to vector<4x128xbf16>
    %c0_3 = arith.constant 0 : index
    %c0_4 = arith.constant 0 : index
    %c0_5 = arith.constant 0 : index
    %c0_6 = arith.constant 0 : index
    %2 = vector.load %arg4[%c0_3, %c0_4, %c0_5, %c0_6] : memref<1x1x4x128xbf16, #tpu.memory_space<vmem>>, vector<1x1x4x128xbf16>
    %3 = vector.shape_cast %2 : vector<1x1x4x128xbf16> to vector<4x128xbf16>
    %4 = tpu.concatenate %1, %3 in 1 : vector<4x128xbf16>, vector<4x128xbf16> -> vector<4x256xbf16>
    %c0_7 = arith.constant 0 : index
    %c0_8 = arith.constant 0 : index
    %c0_9 = arith.constant 0 : index
    %c0_10 = arith.constant 0 : index
    %5 = vector.load %arg5[%c0_7, %c0_8, %c0_9, %c0_10] : memref<1x1x4x12xbf16, #tpu.memory_space<vmem>>, vector<1x1x4x12xbf16>
    %6 = vector.shape_cast %5 : vector<1x1x4x12xbf16> to vector<4x12xbf16>
    %7 = vector.extract_strided_slice %4 {offsets = [0, 1], sizes = [4, 128], strides = [1, 1]} : vector<4x256xbf16> to vector<4x128xbf16>
    %8 = vector.extract_strided_slice %4 {offsets = [0, 2], sizes = [4, 128], strides = [1, 1]} : vector<4x256xbf16> to vector<4x128xbf16>
    %9 = tpu.concatenate %1, %7, %8 in 0 : vector<4x128xbf16>, vector<4x128xbf16>, vector<4x128xbf16> -> vector<12x128xbf16>
    %cst = arith.constant dense<0.000000e+00> : vector<4x128xf32>
    %10 = tpu.matmul %6, %9, %cst {dimension_numbers = #tpu.dot_dimension_numbers<[1], [0], [0], [1], [0, 0, 1, 1], [], []>} : vector<4x12xbf16>, vector<12x128xbf16>, vector<4x128xf32> -> vector<4x128xf32>
    %c0_11 = arith.constant 0 : index
    %c0_12 = arith.constant 0 : index
    %c0_13 = arith.constant 0 : index
    %11 = vector.load %arg6[%c0_11, %c0_12, %c0_13] : memref<1x4x1xf32, #tpu.memory_space<vmem>>, vector<1x4x1xf32>
    %12 = vector.shape_cast %11 : vector<1x4x1xf32> to vector<4x1xf32>
    %13 = vector.broadcast %12 : vector<4x1xf32> to vector<4x128xf32>
    %14 = arith.addf %10, %13 : vector<4x128xf32>
    %cst_14 = arith.constant 1.000000e-01 : f32
    %15 = vector.broadcast %cst_14 : f32 to vector<4x128xf32>
    %16 = arith.mulf %15, %14 : vector<4x128xf32>
    %17 = arith.maximumf %14, %16 : vector<4x128xf32>
    %c128_i32 = arith.constant 128 : i32
    %18 = arith.muli %arg2, %c128_i32 : i32
    %19 = tpu.iota {dimensions = array<i32: 1>} : vector<1x128xi32>
    %20 = vector.broadcast %18 : i32 to vector<1x128xi32>
    %21 = arith.addi %20, %19 : vector<1x128xi32>
    %c32_i32 = arith.constant 32 : i32
    %22 = vector.broadcast %c32_i32 : i32 to vector<1x128xi32>
    %23 = arith.cmpi slt, %21, %22 : vector<1x128xi32>
    %cst_15 = arith.constant 0.000000e+00 : f32
    %24 = vector.shape_cast %23 : vector<1x128xi1> to vector<1x128xi1>
    %25 = vector.broadcast %24 : vector<1x128xi1> to vector<4x128xi1>
    %26 = vector.broadcast %cst_15 : f32 to vector<4x128xf32>
    %27 = arith.select %25, %17, %26 : vector<4x128xi1>, vector<4x128xf32>
    %28 = arith.truncf %27 : vector<4x128xf32> to vector<4x128xbf16>
    %c0_16 = arith.constant 0 : index
    %c0_17 = arith.constant 0 : index
    %c0_18 = arith.constant 0 : index
    %c0_19 = arith.constant 0 : index
    %29 = vector.load %arg7[%c0_16, %c0_17, %c0_18, %c0_19] : memref<1x1x4x128xbf16, #tpu.memory_space<vmem>>, vector<1x1x4x128xbf16>
    %30 = vector.shape_cast %29 : vector<1x1x4x128xbf16> to vector<4x128xbf16>
    %31 = vector.shape_cast %28 : vector<4x128xbf16> to vector<1x1x4x128xbf16>
    tpu.vector_store %arg7[%c0_16, %c0_17, %c0_18, %c0_19], %31 {strides = array<i32>} : memref<1x1x4x128xbf16, #tpu.memory_space<vmem>>, vector<1x1x4x128xbf16>,
    return
  }
  func.func @transform_0(%arg0: i32, %arg1: i32, %arg2: i32) -> (i32, i32, i32, i32) {
    %c0_i32 = arith.constant 0 : i32
    %c0_i32_0 = arith.constant 0 : i32
    return %arg1, %arg0, %c0_i32, %arg2 : i32, i32, i32, i32
  }
  func.func @transform_1(%arg0: i32, %arg1: i32, %arg2: i32) -> (i32, i32, i32, i32) {
    %c1_i32 = arith.constant 1 : i32
    %0 = arith.addi %arg2, %c1_i32 : i32
    %c1_i32_0 = arith.constant 1 : i32
    %1 = arith.muli %0, %c1_i32_0 : i32
    %c0_i32 = arith.constant 0 : i32
    %c0_i32_1 = arith.constant 0 : i32
    return %arg1, %arg0, %c0_i32, %1 : i32, i32, i32, i32
  }
  func.func @transform_2(%arg0: i32, %arg1: i32, %arg2: i32) -> (i32, i32, i32, i32) {
    %c0_i32 = arith.constant 0 : i32
    %c0_i32_0 = arith.constant 0 : i32
    %c0_i32_1 = arith.constant 0 : i32
    %c0_i32_2 = arith.constant 0 : i32
    return %arg0, %c0_i32, %c0_i32_0, %c0_i32_1 : i32, i32, i32, i32
  }
  func.func @transform_3(%arg0: i32, %arg1: i32, %arg2: i32) -> (i32, i32, i32) {
    %c0_i32 = arith.constant 0 : i32
    %c0_i32_0 = arith.constant 0 : i32
    %c0_i32_1 = arith.constant 0 : i32
    return %arg0, %c0_i32, %c0_i32_0 : i32, i32, i32
  }
  func.func @transform_4(%arg0: i32, %arg1: i32, %arg2: i32) -> (i32, i32, i32, i32) {
    %c0_i32 = arith.constant 0 : i32
    %c0_i32_0 = arith.constant 0 : i32
    return %arg1, %arg0, %c0_i32, %arg2 : i32, i32, i32, i32
  }
}

module attributes {stable_mosaic.version = 11 : i64} {
  func.func @_conv1d_kernel(%arg0: i32, %arg1: i32, %arg2: i32, %arg3: memref<1x1x8x128xbf16, #tpu.memory_space<vmem>>, %arg4: memref<1x1x8x128xbf16, #tpu.memory_space<vmem>>, %arg5: memref<1x1x1x24xbf16, #tpu.memory_space<vmem>>, %arg6: memref<1x1x1xf32, #tpu.memory_space<vmem>>, %arg7: memref<1x1x1x128xf32, #tpu.memory_space<vmem>>) attributes {dimension_semantics = [#tpu.dimension_semantics<parallel>, #tpu.dimension_semantics<parallel>, #tpu.dimension_semantics<parallel>], iteration_bounds = array<i64: 1, 2, 1>, scalar_prefetch = 0 : i64, scratch_operands = 0 : i64, tpu.core_type = #tpu.core_type<tc>, window_params = [{transform_indices = @transform_0, window_bounds = array<i64: 1, 1, 8, 128>}, {transform_indices = @transform_1, window_bounds = array<i64: 1, 1, 8, 128>}, {transform_indices = @transform_2, window_bounds = array<i64: 1, 1, 1, 24>}, {transform_indices = @transform_3, window_bounds = array<i64: 1, 1, 1>}, {transform_indices = @transform_4, window_bounds = array<i64: 1, 1, 1, 128>}]} {
    %c0 = arith.constant 0 : index
    %c0_0 = arith.constant 0 : index
    %c0_1 = arith.constant 0 : index
    %c0_2 = arith.constant 0 : index
    %0 = vector.load %arg3[%c0, %c0_0, %c0_1, %c0_2] : memref<1x1x8x128xbf16, #tpu.memory_space<vmem>>, vector<1x1x8x128xbf16>
    %1 = vector.shape_cast %0 : vector<1x1x8x128xbf16> to vector<8x128xbf16>
    %c0_3 = arith.constant 0 : index
    %c0_4 = arith.constant 0 : index
    %c0_5 = arith.constant 0 : index
    %c0_6 = arith.constant 0 : index
    %2 = vector.load %arg4[%c0_3, %c0_4, %c0_5, %c0_6] : memref<1x1x8x128xbf16, #tpu.memory_space<vmem>>, vector<1x1x8x128xbf16>
    %3 = vector.shape_cast %2 : vector<1x1x8x128xbf16> to vector<8x128xbf16>
    %4 = tpu.concatenate %1, %3 in 1 : vector<8x128xbf16>, vector<8x128xbf16> -> vector<8x256xbf16>
    %c0_7 = arith.constant 0 : index
    %c0_8 = arith.constant 0 : index
    %c0_9 = arith.constant 0 : index
    %c0_10 = arith.constant 0 : index
    %5 = vector.load %arg5[%c0_7, %c0_8, %c0_9, %c0_10] : memref<1x1x1x24xbf16, #tpu.memory_space<vmem>>, vector<1x1x1x24xbf16>
    %6 = vector.shape_cast %5 : vector<1x1x1x24xbf16> to vector<1x24xbf16>
    %7 = vector.extract_strided_slice %4 {offsets = [0, 1], sizes = [8, 128], strides = [1, 1]} : vector<8x256xbf16> to vector<8x128xbf16>
    %8 = vector.extract_strided_slice %4 {offsets = [0, 2], sizes = [8, 128], strides = [1, 1]} : vector<8x256xbf16> to vector<8x128xbf16>
    %9 = tpu.concatenate %1, %7, %8 in 0 : vector<8x128xbf16>, vector<8x128xbf16>, vector<8x128xbf16> -> vector<24x128xbf16>
    %cst = arith.constant dense<0.000000e+00> : vector<1x128xf32>
    %10 = tpu.matmul %6, %9, %cst {dimension_numbers = #tpu.dot_dimension_numbers<[1], [0], [0], [1], [0, 0, 1, 1], [], []>} : vector<1x24xbf16>, vector<24x128xbf16>, vector<1x128xf32> -> vector<1x128xf32>
    %c0_11 = arith.constant 0 : index
    %c0_12 = arith.constant 0 : index
    %c0_13 = arith.constant 0 : index
    %11 = vector.load %arg6[%c0_11, %c0_12, %c0_13] : memref<1x1x1xf32, #tpu.memory_space<vmem>>, vector<1x1x1xf32>
    %12 = vector.shape_cast %11 : vector<1x1x1xf32> to vector<1x1xf32>
    %13 = vector.broadcast %12 : vector<1x1xf32> to vector<1x128xf32>
    %14 = arith.addf %10, %13 : vector<1x128xf32>
    %c128_i32 = arith.constant 128 : i32
    %15 = arith.muli %arg2, %c128_i32 : i32
    %16 = tpu.iota {dimensions = array<i32: 1>} : vector<1x128xi32>
    %17 = vector.broadcast %15 : i32 to vector<1x128xi32>
    %18 = arith.addi %17, %16 : vector<1x128xi32>
    %c32_i32 = arith.constant 32 : i32
    %19 = vector.broadcast %c32_i32 : i32 to vector<1x128xi32>
    %20 = arith.cmpi slt, %18, %19 : vector<1x128xi32>
    %cst_14 = arith.constant 0.000000e+00 : f32
    %21 = vector.broadcast %cst_14 : f32 to vector<1x128xf32>
    %22 = arith.select %20, %14, %21 : vector<1x128xi1>, vector<1x128xf32>
    %c0_15 = arith.constant 0 : index
    %c0_16 = arith.constant 0 : index
    %c0_17 = arith.constant 0 : index
    %c0_18 = arith.constant 0 : index
    %23 = vector.load %arg7[%c0_15, %c0_16, %c0_17, %c0_18] : memref<1x1x1x128xf32, #tpu.memory_space<vmem>>, vector<1x1x1x128xf32>
    %24 = vector.shape_cast %23 : vector<1x1x1x128xf32> to vector<1x128xf32>
    %25 = vector.shape_cast %22 : vector<1x128xf32> to vector<1x1x1x128xf32>
    tpu.vector_store %arg7[%c0_15, %c0_16, %c0_17, %c0_18], %25 {strides = array<i32>} : memref<1x1x1x128xf32, #tpu.memory_space<vmem>>, vector<1x1x1x128xf32>,
    return
  }
  func.func @transform_0(%arg0: i32, %arg1: i32, %arg2: i32) -> (i32, i32, i32, i32) {
    %c0_i32 = arith.constant 0 : i32
    %c0_i32_0 = arith.constant 0 : i32
    return %arg1, %arg0, %c0_i32, %arg2 : i32, i32, i32, i32
  }
  func.func @transform_1(%arg0: i32, %arg1: i32, %arg2: i32) -> (i32, i32, i32, i32) {
    %c1_i32 = arith.constant 1 : i32
    %0 = arith.addi %arg2, %c1_i32 : i32
    %c1_i32_0 = arith.constant 1 : i32
    %1 = arith.muli %0, %c1_i32_0 : i32
    %c0_i32 = arith.constant 0 : i32
    %c0_i32_1 = arith.constant 0 : i32
    return %arg1, %arg0, %c0_i32, %1 : i32, i32, i32, i32
  }
  func.func @transform_2(%arg0: i32, %arg1: i32, %arg2: i32) -> (i32, i32, i32, i32) {
    %c0_i32 = arith.constant 0 : i32
    %c0_i32_0 = arith.constant 0 : i32
    %c0_i32_1 = arith.constant 0 : i32
    %c0_i32_2 = arith.constant 0 : i32
    return %arg0, %c0_i32, %c0_i32_0, %c0_i32_1 : i32, i32, i32, i32
  }
  func.func @transform_3(%arg0: i32, %arg1: i32, %arg2: i32) -> (i32, i32, i32) {
    %c0_i32 = arith.constant 0 : i32
    %c0_i32_0 = arith.constant 0 : i32
    %c0_i32_1 = arith.constant 0 : i32
    return %arg0, %c0_i32, %c0_i32_0 : i32, i32, i32
  }
  func.func @transform_4(%arg0: i32, %arg1: i32, %arg2: i32) -> (i32, i32, i32, i32) {
    %c0_i32 = arith.constant 0 : i32
    %c0_i32_0 = arith.constant 0 : i32
    return %arg1, %arg0, %c0_i32, %arg2 : i32, i32, i32, i32
  }
}

</mosaic_0001>

<llo_original>
// kernel: fwd.4
$region0: #{fwd.4}
  #allocation0 [shape = 'u32[]', space=smem, size = 0x4, offset = 0x4, fixed_abs, tag = 'smem constant byte address 0x4 - core index']
  #allocation1 [shape = 'u32[144,128]{1,0:T(1,128)}', space=vmem, size = 0x12000, scoped, tag = 'internal scratch']
  %s0 = inlined_call_operand.vmem [shape: bf16[2,1,1,256], index: 0, kind: input, shape index: {}, may-alias: {0,1}]
  %s1 = inlined_call_operand.vmem [shape: bf16[2,1,1,256], index: 1, kind: input, shape index: {}, may-alias: {0,1}]
  %s2 = inlined_call_operand.vmem [shape: bf16[1,1,4,5], index: 2, kind: input, shape index: {}]
  %s3 = inlined_call_operand.vmem [shape: f32[1,4,1], index: 3, kind: input, shape index: {}]
  %s4 = inlined_call_operand.vmem [shape: bf16[2,1,4,128], index: 4, kind: output, shape index: {}]
  %s5 = sld [smem:[#allocation0]]
  $region49: #{fwd.4} parent=0
    _
  %s7 = ssub.s32 1, %s5
  %s8 = scalar_select 0, %s7, %s5
  loop: start=0, step=1, limit=4
  $region2: #{fwd.4} parent=0 // loop_pre_header
    _
  $region3: #{fwd.4} parent=0 // loop_header
    %s10 = sphi 0, %s14
    %p11 = scmp.ge.s32.totalorder %s10, 4
    %s17 = sphi 0, %s36
    %s18 = sphi 0, %s32
    %s19 = sphi 0, %s28
    %s20 = sphi 0, %s17
    %s21 = sphi 0, %s18
    %s22 = sphi 0, %s19
    %s23 = sphi 0, %s20
    %s24 = sphi 0, %s21
    %s25 = sphi 0, %s22
    %s43 = sphi 0, %s45
    %s46 = sphi 0, %s43
    %s47 = sphi 0, %s46
    %s63 = sphi 0, %s47
    %s75 = sphi 0, %s77
    %s78 = sphi 0, %s75
    %s79 = sphi 0, %s78
    %s95 = sphi 0, %s79
    %s101 = sphi 0, %s103
    %s104 = sphi 0, %s101
    %s105 = sphi 0, %s104
    %s121 = sphi 0, %s105
    %s127 = sphi 0, %s129
    %s130 = sphi 0, %s127
    %s131 = sphi 0, %s130
    %s147 = sphi 0, %s131
    %s157 = sphi 0, %s159
    %s160 = sphi 0, %s157
    %s161 = sphi 0, %s160
    %s177 = sphi 0, %s161
  $region4: #{fwd.4} parent=0 // loop_header_branch
    %13 = sbr.rel (%p11) target = $region8
  $region5: #{fwd.4} parent=0 // loop_body
    %s15 = ssub.s32 %s10, 1
    %s16 = ssub.s32 %s10, 2
    %s26 = sadd.s32 1, %s19
    %p27 = scmp.ge.s32.totalorder %s26, 1
    %s28 = scalar_select %p27, 0, %s26
    %s29 = sadd.s32 1, %s18
    %s30 = scalar_select %p27, %s29, %s18
    %p31 = scmp.ge.s32.totalorder %s30, 2
    %s32 = scalar_select %p31, 0, %s30
    %s33 = sadd.s32 1, %s17
    %s34 = scalar_select %p31, %s33, %s17
    %p35 = scmp.ge.s32.totalorder %s34, 1
    %s36 = scalar_select %p35, 0, %s34
    %s37 = ssub.s32 %s18, %s32
    %s38 = ssub.s32 %s17, %s36
    %s39 = sor.u32 %s37, %s38
    %s40 = ssub.s32 %s19, %s28
    %s41 = sor.u32 %s39, %s40
    %p42 = scmp.eq.s32.totalorder %s41, 0
    %s44 = sadd.s32 %s43, 1
    %s45 = scalar_select %p42, %s43, %s44
    %p48 = pneg %p42
    %p49 = scmp.eq.s32.totalorder %s10, 1
    %p50 = por %p48, %p49
    %p51 = scmp.ne.s32.totalorder %s43, %s46
    %p52 = scmp.eq.s32.totalorder %s10, 0
    %p53 = por %p51, %p52
    %p54 = scmp.ne.s32.totalorder %s43, %s46
    %p55 = scmp.eq.s32.totalorder %s15, 1
    %p56 = por %p54, %p55
    %p57 = scmp.ne.s32.totalorder %s46, %s47
    %p58 = scmp.eq.s32.totalorder %s15, 0
    %p59 = por %p57, %p58
    %p60 = scmp.ne.s32.totalorder %s46, %s47
    %p61 = scmp.eq.s32.totalorder %s16, 1
    %p62 = por %p60, %p61
    %p64 = scmp.ne.s32.totalorder %s47, %s63
    %p65 = scmp.eq.s32.totalorder %s16, 0
    %p66 = por %p64, %p65
    %s67 = sadd.s32 %s19, 1
    %s68 = sadd.s32 %s28, 1
    %s69 = ssub.s32 %s18, %s32
    %s70 = ssub.s32 %s17, %s36
    %s71 = sor.u32 %s69, %s70
    %s72 = ssub.s32 %s67, %s68
    %s73 = sor.u32 %s71, %s72
    %p74 = scmp.eq.s32.totalorder %s73, 0
    %s76 = sadd.s32 %s75, 1
    %s77 = scalar_select %p74, %s75, %s76
    %p80 = pneg %p74
    %p81 = scmp.eq.s32.totalorder %s10, 1
    %p82 = por %p80, %p81
    %p83 = scmp.ne.s32.totalorder %s75, %s78
    %p84 = scmp.eq.s32.totalorder %s10, 0
    %p85 = por %p83, %p84
    %p86 = scmp.ne.s32.totalorder %s75, %s78
    %p87 = scmp.eq.s32.totalorder %s15, 1
    %p88 = por %p86, %p87
    %p89 = scmp.ne.s32.totalorder %s78, %s79
    %p90 = scmp.eq.s32.totalorder %s15, 0
    %p91 = por %p89, %p90
    %p92 = scmp.ne.s32.totalorder %s78, %s79
    %p93 = scmp.eq.s32.totalorder %s16, 1
    %p94 = por %p92, %p93
    %p96 = scmp.ne.s32.totalorder %s79, %s95
    %p97 = scmp.eq.s32.totalorder %s16, 0
    %p98 = por %p96, %p97
    %s99 = ssub.s32 %s17, %s36
    %p100 = scmp.eq.s32.totalorder %s99, 0
    %s102 = sadd.s32 %s101, 1
    %s103 = scalar_select %p100, %s101, %s102
    %p106 = pneg %p100
    %p107 = scmp.eq.s32.totalorder %s10, 1
    %p108 = por %p106, %p107
    %p109 = scmp.ne.s32.totalorder %s101, %s104
    %p110 = scmp.eq.s32.totalorder %s10, 0
    %p111 = por %p109, %p110
    %p112 = scmp.ne.s32.totalorder %s101, %s104
    %p113 = scmp.eq.s32.totalorder %s15, 1
    %p114 = por %p112, %p113
    %p115 = scmp.ne.s32.totalorder %s104, %s105
    %p116 = scmp.eq.s32.totalorder %s15, 0
    %p117 = por %p115, %p116
    %p118 = scmp.ne.s32.totalorder %s104, %s105
    %p119 = scmp.eq.s32.totalorder %s16, 1
    %p120 = por %p118, %p119
    %p122 = scmp.ne.s32.totalorder %s105, %s121
    %p123 = scmp.eq.s32.totalorder %s16, 0
    %p124 = por %p122, %p123
    %s125 = ssub.s32 %s17, %s36
    %p126 = scmp.eq.s32.totalorder %s125, 0
    %s128 = sadd.s32 %s127, 1
    %s129 = scalar_select %p126, %s127, %s128
    %p132 = pneg %p126
    %p133 = scmp.eq.s32.totalorder %s10, 1
    %p134 = por %p132, %p133
    %p135 = scmp.ne.s32.totalorder %s127, %s130
    %p136 = scmp.eq.s32.totalorder %s10, 0
    %p137 = por %p135, %p136
    %p138 = scmp.ne.s32.totalorder %s127, %s130
    %p139 = scmp.eq.s32.totalorder %s15, 1
    %p140 = por %p138, %p139
    %p141 = scmp.ne.s32.totalorder %s130, %s131
    %p142 = scmp.eq.s32.totalorder %s15, 0
    %p143 = por %p141, %p142
    %p144 = scmp.ne.s32.totalorder %s130, %s131
    %p145 = scmp.eq.s32.totalorder %s16, 1
    %p146 = por %p144, %p145
    %p148 = scmp.ne.s32.totalorder %s131, %s147
    %p149 = scmp.eq.s32.totalorder %s16, 0
    %p150 = por %p148, %p149
    %s151 = ssub.s32 %s18, %s32
    %s152 = ssub.s32 %s17, %s36
    %s153 = sor.u32 %s151, %s152
    %s154 = ssub.s32 %s19, %s28
    %s155 = sor.u32 %s153, %s154
    %p156 = scmp.eq.s32.totalorder %s155, 0
    %s158 = sadd.s32 %s157, 1
    %s159 = scalar_select %p156, %s157, %s158
    %p162 = pneg %p156
    %p163 = scmp.eq.s32.totalorder %s10, 1
    %p164 = por %p162, %p163
    %p165 = scmp.ne.s32.totalorder %s157, %s160
    %p166 = scmp.eq.s32.totalorder %s10, 0
    %p167 = por %p165, %p166
    %p168 = scmp.ne.s32.totalorder %s157, %s160
    %p169 = scmp.eq.s32.totalorder %s15, 1
    %p170 = por %p168, %p169
    %p171 = scmp.ne.s32.totalorder %s160, %s161
    %p172 = scmp.eq.s32.totalorder %s15, 0
    %p173 = por %p171, %p172
    %p174 = scmp.ne.s32.totalorder %s160, %s161
    %p175 = scmp.eq.s32.totalorder %s16, 1
    %p176 = por %p174, %p175
    %p178 = scmp.ne.s32.totalorder %s161, %s177
    %p179 = scmp.eq.s32.totalorder %s16, 0
    %p180 = por %p178, %p179
    %p181 = scmp.le.s32.totalorder 1, %s10
    %p182 = scmp.lt.s32.totalorder %s10, 3
    %p183 = pnand %p181, %p182
    %p184 = pneg %p183
    // Predicated region
    $region9: #{fwd.4} parent=5 // pred_check
      _
    $region10: #{fwd.4} parent=5 // pred_check_branch
      %186 = sbr.rel (%p183) target = $region12
    $region11: #{fwd.4} parent=5 // pred_region
      %s187 = ssub.s32 %s10, 1
      // Predicated region
      $region13: #{fwd.4} parent=11 // pred_check
        %p188 = pneg %p117
      $region14: #{fwd.4} parent=11 // pred_check_branch
        %190 = sbr.rel (%p188) target = $region16
      $region15: #{fwd.4} parent=11 // pred_region
        %p191 = scmp.lt.s32.totalorder %s20, 0
        %s192 = scalar_select %p191, %s20, 0
        %s193 = smul.addr %s192, 2
        %s194 = scalar_lea.vmem %s2, %s193
      $region16: #{fwd.4} parent=11 // pred_fallthru
        _
      // Predicated region
      $region17: #{fwd.4} parent=11 // pred_check
        %p195 = pneg %p143
      $region18: #{fwd.4} parent=11 // pred_check_branch
        %197 = sbr.rel (%p195) target = $region20
      $region19: #{fwd.4} parent=11 // pred_region
        %p198 = scmp.lt.s32.totalorder %s20, 0
        %s199 = scalar_select %p198, %s20, 0
        %s200 = smul.addr %s199, 4
        %s201 = scalar_lea.vmem %s3, %s200
      $region20: #{fwd.4} parent=11 // pred_fallthru
        _
    $region12: #{fwd.4} parent=5 // pred_fallthru
      _
    %p202 = scmp.lt.s32.totalorder %s10, 2
    // Predicated region
    $region21: #{fwd.4} parent=5 // pred_check
      %p203 = pneg %p202
    $region22: #{fwd.4} parent=5 // pred_check_branch
      %205 = sbr.rel (%p203) target = $region24
    $region23: #{fwd.4} parent=5 // pred_region
      // Predicated region
      $region25: #{fwd.4} parent=23 // pred_check
        %p206 = pneg %p53
      $region26: #{fwd.4} parent=23 // pred_check_branch
        %208 = sbr.rel (%p206) target = $region28
      $region27: #{fwd.4} parent=23 // pred_region
        %p209 = scmp.lt.s32.totalorder %s18, 1
        %s210 = scalar_select %p209, %s18, 1
        %p211 = scmp.lt.s32.totalorder %s17, 0
        %s212 = scalar_select %p211, %s17, 0
        %p213 = scmp.lt.s32.totalorder %s19, 1
        %s214 = scalar_select %p213, %s19, 1
        %s215 = smul.addr %s212, 2
        %s216 = sadd.s32 %s214, %s215
        %s217 = smul.addr %s210, 2
        %s218 = sadd.s32 %s216, %s217
        %s219 = scalar_lea.vmem %s0, %s218
      $region28: #{fwd.4} parent=23 // pred_fallthru
        _
      // Predicated region
      $region29: #{fwd.4} parent=23 // pred_check
        %p220 = pneg %p85
      $region30: #{fwd.4} parent=23 // pred_check_branch
        %222 = sbr.rel (%p220) target = $region32
      $region31: #{fwd.4} parent=23 // pred_region
        %s223 = sadd.s32 %s19, 1
        %p224 = scmp.lt.s32.totalorder %s18, 1
        %s225 = scalar_select %p224, %s18, 1
        %p226 = scmp.lt.s32.totalorder %s17, 0
        %s227 = scalar_select %p226, %s17, 0
        %p228 = scmp.lt.s32.totalorder %s223, 1
        %s229 = scalar_select %p228, %s223, 1
        %s230 = smul.addr %s227, 2
        %s231 = sadd.s32 %s229, %s230
        %s232 = smul.addr %s225, 2
        %s233 = sadd.s32 %s231, %s232
        %s234 = scalar_lea.vmem %s1, %s233
        %s235 = sadd.s32 %s19, 1
      $region32: #{fwd.4} parent=23 // pred_fallthru
        _
    $region24: #{fwd.4} parent=5 // pred_fallthru
      _
    %p236 = scmp.le.s32.totalorder 1, %s10
    %p237 = scmp.lt.s32.totalorder %s10, 3
    %p238 = pnand %p236, %p237
    %p239 = pneg %p238
    // Predicated region
    $region33: #{fwd.4} parent=5 // pred_check
      _
    $region34: #{fwd.4} parent=5 // pred_check_branch
      %241 = sbr.rel (%p238) target = $region36
    $region35: #{fwd.4} parent=5 // pred_region
      %s242 = ssub.s32 %s10, 1
      %p243 = scmp.lt.s32.totalorder %s21, 1
      %s244 = scalar_select %p243, %s21, 1
      %p245 = scmp.lt.s32.totalorder %s20, 0
      %s246 = scalar_select %p245, %s20, 0
      %p247 = scmp.lt.s32.totalorder %s22, 1
      %s248 = scalar_select %p247, %s22, 1
      %s249 = smul.addr %s246, 2
      %s250 = sadd.s32 %s248, %s249
      %s251 = smul.addr %s244, 2
      %s252 = sadd.s32 %s250, %s251
      %s253 = scalar_lea.vmem %s0, %s252
      %p254 = pneg %p59
      %p255 = pneg %p56
      %s256 = sadd.s32 %s22, 1
      %p257 = scmp.lt.s32.totalorder %s21, 1
      %s258 = scalar_select %p257, %s21, 1
      %p259 = scmp.lt.s32.totalorder %s20, 0
      %s260 = scalar_select %p259, %s20, 0
      %p261 = scmp.lt.s32.totalorder %s256, 1
      %s262 = scalar_select %p261, %s256, 1
      %s263 = smul.addr %s260, 2
      %s264 = sadd.s32 %s262, %s263
      %s265 = smul.addr %s258, 2
      %s266 = sadd.s32 %s264, %s265
      %s267 = scalar_lea.vmem %s1, %s266
      %p268 = pneg %p91
      %p269 = pneg %p88
      %p270 = scmp.lt.s32.totalorder %s20, 0
      %s271 = scalar_select %p270, %s20, 0
      %s272 = smul.addr %s271, 2
      %s273 = scalar_lea.vmem %s2, %s272
      %p274 = pneg %p117
      %p275 = pneg %p114
      %p276 = scmp.lt.s32.totalorder %s20, 0
      %s277 = scalar_select %p276, %s20, 0
      %s278 = smul.addr %s277, 4
      %s279 = scalar_lea.vmem %s3, %s278
      %p280 = pneg %p143
      %p281 = pneg %p140
      %p282 = pneg %p173
      %p283 = pneg %p170
      %p284 = scmp.lt.s32.totalorder %s21, 1
      %s285 = scalar_select %p284, %s21, 1
      %p286 = scmp.lt.s32.totalorder %s20, 0
      %s287 = scalar_select %p286, %s20, 0
      %p288 = scmp.lt.s32.totalorder %s22, 0
      %s289 = scalar_select %p288, %s22, 0
      %s290 = sadd.s32 %s289, %s287
      %s291 = sadd.s32 %s290, %s285
      %s292 = smul.addr %s291, 2
      %s293 = scalar_lea.vmem %s4, %s292
      %p294 = scmp.lt.s32.totalorder %s21, 1
      %s295 = scalar_select %p294, %s21, 1
      %p296 = scmp.lt.s32.totalorder %s20, 0
      %s297 = scalar_select %p296, %s20, 0
      %p298 = scmp.lt.s32.totalorder %s22, 1
      %s299 = scalar_select %p298, %s22, 1
      %s300 = smul.addr %s297, 2
      %s301 = sadd.s32 %s299, %s300
      %s302 = smul.addr %s295, 2
      %s303 = sadd.s32 %s301, %s302
      %s304 = scalar_lea.vmem %s0, %s303
      %s305 = sadd.s32 %s22, 1
      %p306 = scmp.lt.s32.totalorder %s21, 1
      %s307 = scalar_select %p306, %s21, 1
      %p308 = scmp.lt.s32.totalorder %s20, 0
      %s309 = scalar_select %p308, %s20, 0
      %p310 = scmp.lt.s32.totalorder %s305, 1
      %s311 = scalar_select %p310, %s305, 1
      %s312 = smul.addr %s309, 2
      %s313 = sadd.s32 %s311, %s312
      %s314 = smul.addr %s307, 2
      %s315 = sadd.s32 %s313, %s314
      %s316 = scalar_lea.vmem %s1, %s315
      %s317 = sadd.s32 %s22, 1
      %p318 = scmp.lt.s32.totalorder %s20, 0
      %s319 = scalar_select %p318, %s20, 0
      %s320 = smul.addr %s319, 2
      %s321 = scalar_lea.vmem %s2, %s320
      %p322 = scmp.lt.s32.totalorder %s20, 0
      %s323 = scalar_select %p322, %s20, 0
      %s324 = smul.addr %s323, 4
      %s325 = scalar_lea.vmem %s3, %s324
      %p326 = scmp.lt.s32.totalorder %s21, 1
      %s327 = scalar_select %p326, %s21, 1
      %p328 = scmp.lt.s32.totalorder %s20, 0
      %s329 = scalar_select %p328, %s20, 0
      %p330 = scmp.lt.s32.totalorder %s22, 0
      %s331 = scalar_select %p330, %s22, 0
      %s332 = sadd.s32 %s331, %s329
      %s333 = sadd.s32 %s332, %s327
      %s334 = smul.addr %s333, 2
      %s335 = scalar_lea.vmem %s4, %s334
      %v337 = vld [vmem:[%s304] sm:$0x1]
      %v338 = vld [vmem:[%s316] sm:$0x1]
      %v339 = vld [vmem:[%s321] sm:$0x3]
      %v341 = vshll.u32 %v337, 16
      %v344 = vshll.u32 %v338, 16
      %346 = vrot.lane.b32.xlu0 %v341, 127
      %v347 = vpop.permute.xlu0 %346
      %348 = vrot.lane.b32.xlu0 %v344, 127
      %v349 = vpop.permute.xlu0 %348
      %vm350 = vcmask 1039360
      %v351 = vsel %vm350, %v347, %v349
      %v355 = vrot.slane %v337, 7
      %v356 = vrot.slane %v338, 7
      %357 = vrot.lane.b32.xlu0 %v355, 126
      %v358 = vpop.permute.xlu0 %357
      %359 = vrot.lane.b32.xlu0 %v356, 126
      %v360 = vpop.permute.xlu0 %359
      %vm361 = vcmask 1031168
      %v362 = vsel %vm361, %v358, %v360
      %v363 = vrot.slane %v341, 7
      %v364 = vrot.slane %v344, 7
      %365 = vrot.lane.b32.xlu0 %v363, 125
      %v366 = vpop.permute.xlu0 %365
      %367 = vrot.lane.b32.xlu0 %v364, 125
      %v368 = vpop.permute.xlu0 %367
      %vm369 = vcmask 1022976
      %v370 = vsel %vm369, %v366, %v368
      %v372 = vrot.slane %v337, 6
      %v373 = vrot.slane %v338, 6
      %374 = vrot.lane.b32.xlu0 %v372, 124
      %v375 = vpop.permute.xlu0 %374
      %376 = vrot.lane.b32.xlu0 %v373, 124
      %v377 = vpop.permute.xlu0 %376
      %vm378 = vcmask 1014784
      %v379 = vsel %vm378, %v375, %v377
      %vm380 = vcmask 1040384
      %vm381 = vsmask.f32 256
      %vm382 = vmand %vm380, %vm381
      %v383 = vsel %vm382, %v337, %v351
      %vm384 = vcmask 1040384
      %v387 = vsel %vm384, %v383, %v362
      %vm389 = vcmask 1041408
      %vm390 = vsmask.f32 1280
      %vm391 = vmand %vm389, %vm390
      %v392 = vsel %vm391, %v387, %v370
      %vm393 = vcmask 1041408
      %v396 = vsel %vm393, %v392, %v379
      %v397 = vld [vmem:[%s325] sm:$0xf]
      %399 = vset.pattern.permute.xlu0 0
      %400 = vperm.xlu0 %399, %v397
      %v401 = vpop.permute.xlu0 %400
      %vm403 = vcmask 39936
      %v405 = vsel %vm403, %v339, 0
      %vm407 = vcmask 1042432
      %v408 = vsel %vm393, 4294967295, 65535
      %v409 = vsel %vm407, %v408, 0
      %v410 = vand.u32 %v396, %v409
      %412 = vmatprep.subr.bf16.mxu0 0
      %413 = vmatpush1.bf16.msra.mxu0 %v410
      %414 = vmatprep.subr.bf16.mxu0 0
      %415 = vmatpush1.bf16.msra.mxu0 0
      %416 = vmatprep.subr.bf16.mxu0 0
      %417 = vmatpush1.bf16.msra.mxu0 0
      %418 = vmatprep.subr.bf16.mxu0 0
      %419 = vmatpush1.bf16.msra.mxu0 0
      %420 = vmatprep.subr.bf16.mxu0 0
      %421 = vmatpush1.bf16.msra.mxu0 0
      %422 = vmatprep.subr.bf16.mxu0 0
      %423 = vmatpush1.bf16.msra.mxu0 0
      %424 = vmatprep.subr.bf16.mxu0 0
      %425 = vmatpush1.bf16.msra.mxu0 0
      %426 = vmatprep.subr.bf16.mxu0 0
      %427 = vmatpush1.bf16.msra.mxu0 0
      %428 = vmatprep.subr.bf16.mxu0 0
      %429 = vmatpush1.bf16.msra.mxu0 0
      %430 = vmatprep.subr.bf16.mxu0 0
      %431 = vmatpush1.bf16.msra.mxu0 0
      %432 = vmatprep.subr.bf16.mxu0 0
      %433 = vmatpush1.bf16.msra.mxu0 0
      %434 = vmatprep.subr.bf16.mxu0 0
      %435 = vmatpush1.bf16.msra.mxu0 0
      %436 = vmatprep.subr.bf16.mxu0 0
      %437 = vmatpush1.bf16.msra.mxu0 0
      %438 = vmatprep.subr.bf16.mxu0 0
      %439 = vmatpush1.bf16.msra.mxu0 0
      %440 = vmatprep.subr.bf16.mxu0 0
      %441 = vmatpush1.bf16.msra.mxu0 0
      %442 = vmatprep.subr.bf16.mxu0 0
      %443 = vmatpush1.bf16.msra.mxu0 0
      %444 = vmatprep.mubr.bf16.mxu0 0
      %445 = vmatmul.mubr.bf16.gmra.mrb[0].mxu0 %v405
      %v446 = vpop.f32.mrb[0].mxu0
      %v447 = vadd.f32 %v401, %v446
      %v448 = vpop.f32.mrb[0].mxu0
      %v449 = vpop.f32.mrb[0].mxu0
      %v450 = vpop.f32.mrb[0].mxu0
      %451 = vdwg.mxu0
      %v452 = vmul.f32 %v447, 0.1
      %v453 = vmax.f32 %v447, %v452
      %s454 = smul.u32 %s22, 128
      %v455 = vlaneseq
      %v456 = vand.u32 %v455, 127
      %v457 = vstv %s454
      %v458 = vadd.s32 %v457, %v456
      %vm459 = vcmp.lt.s32.totalorder %v458, 64
      %v460 = vsel %vm459, 1, 0
      %vm461 = vcmp.eq.s32.totalorder %v460, 1
      %v462 = vsel %vm461, %v453, 0.0
      %v463 = vpack.c.bf16 %v462, %v462
      %464 = vst [vmem:[%s335] sm:$0x3] %v463
      %p465 = scmp.lt.s32.totalorder %s21, 1
      %s466 = scalar_select %p465, %s21, 1
      %p467 = scmp.lt.s32.totalorder %s20, 0
      %s468 = scalar_select %p467, %s20, 0
      %p469 = scmp.lt.s32.totalorder %s22, 0
      %s470 = scalar_select %p469, %s22, 0
      %s471 = sadd.s32 %s470, %s468
      %s472 = sadd.s32 %s471, %s466
      %s473 = smul.addr %s472, 2
      %s474 = scalar_lea.vmem %s4, %s473
      // Predicated region
      $region37: #{fwd.4} parent=35 // pred_check
        %p475 = pneg %p170
      $region38: #{fwd.4} parent=35 // pred_check_branch
        %477 = sbr.rel (%p475) target = $region40
      $region39: #{fwd.4} parent=35 // pred_region
        _
      $region40: #{fwd.4} parent=35 // pred_fallthru
        _
    $region36: #{fwd.4} parent=5 // pred_fallthru
      _
    %p478 = scmp.le.s32.totalorder 2, %s10
    // Predicated region
    $region41: #{fwd.4} parent=5 // pred_check
      %p479 = pneg %p478
    $region42: #{fwd.4} parent=5 // pred_check_branch
      %481 = sbr.rel (%p479) target = $region44
    $region43: #{fwd.4} parent=5 // pred_region
      %s482 = ssub.s32 %s10, 2
      // Predicated region
      $region45: #{fwd.4} parent=43 // pred_check
        %p483 = pneg %p176
      $region46: #{fwd.4} parent=43 // pred_check_branch
        %485 = sbr.rel (%p483) target = $region48
      $region47: #{fwd.4} parent=43 // pred_region
        %p486 = scmp.lt.s32.totalorder %s24, 1
        %s487 = scalar_select %p486, %s24, 1
        %p488 = scmp.lt.s32.totalorder %s23, 0
        %s489 = scalar_select %p488, %s23, 0
        %p490 = scmp.lt.s32.totalorder %s25, 0
        %s491 = scalar_select %p490, %s25, 0
        %s492 = sadd.s32 %s491, %s489
        %s493 = sadd.s32 %s492, %s487
        %s494 = smul.addr %s493, 2
        %s495 = scalar_lea.vmem %s4, %s494
      $region48: #{fwd.4} parent=43 // pred_fallthru
        _
    $region44: #{fwd.4} parent=5 // pred_fallthru
      _
  $region6: #{fwd.4} parent=0 // loop_footer
    %s14 = sadd.s32 1, %s10
  $region7: #{fwd.4} parent=0 // loop_footer_branch
    %9 = sbr.rel target = $region3
  $region8: #{fwd.4} parent=0 // loop_exit
    _

// kernel: fwd.5
$region0: #{fwd.5}
  #allocation0 [shape = 'u32[]', space=smem, size = 0x4, offset = 0x4, fixed_abs, tag = 'smem constant byte address 0x4 - core index']
  #allocation1 [shape = 'u32[144,128]{1,0:T(1,128)}', space=vmem, size = 0x12000, scoped, tag = 'internal scratch']
  %s0 = inlined_call_operand.vmem [shape: bf16[2,2,4,256], index: 0, kind: input, shape index: {}, may-alias: {0,1}]
  %s1 = inlined_call_operand.vmem [shape: bf16[2,2,4,256], index: 1, kind: input, shape index: {}, may-alias: {0,1}]
  %s2 = inlined_call_operand.vmem [shape: bf16[2,1,4,12], index: 2, kind: input, shape index: {}]
  %s3 = inlined_call_operand.vmem [shape: f32[2,4,1], index: 3, kind: input, shape index: {}]
  %s4 = inlined_call_operand.vmem [shape: bf16[2,2,4,128], index: 4, kind: output, shape index: {}]
  %s5 = sld [smem:[#allocation0]]
  $region49: #{fwd.5} parent=0
    _
  %s7 = ssub.s32 1, %s5
  %s8 = scalar_select 0, %s7, %s5
  loop: start=0, step=1, limit=6
  $region2: #{fwd.5} parent=0 // loop_pre_header
    _
  $region3: #{fwd.5} parent=0 // loop_header
    %s10 = sphi 0, %s14
    %p11 = scmp.ge.s32.totalorder %s10, 6
    %s17 = sphi 0, %s36
    %s18 = sphi 0, %s32
    %s19 = sphi 0, %s28
    %s20 = sphi 0, %s17
    %s21 = sphi 0, %s18
    %s22 = sphi 0, %s19
    %s23 = sphi 0, %s20
    %s24 = sphi 0, %s21
    %s25 = sphi 0, %s22
    %s43 = sphi 0, %s45
    %s46 = sphi 0, %s43
    %s47 = sphi 0, %s46
    %s63 = sphi 0, %s47
    %s75 = sphi 0, %s77
    %s78 = sphi 0, %s75
    %s79 = sphi 0, %s78
    %s95 = sphi 0, %s79
    %s101 = sphi 0, %s103
    %s104 = sphi 0, %s101
    %s105 = sphi 0, %s104
    %s121 = sphi 0, %s105
    %s127 = sphi 0, %s129
    %s130 = sphi 0, %s127
    %s131 = sphi 0, %s130
    %s147 = sphi 0, %s131
    %s157 = sphi 0, %s159
    %s160 = sphi 0, %s157
    %s161 = sphi 0, %s160
    %s177 = sphi 0, %s161
  $region4: #{fwd.5} parent=0 // loop_header_branch
    %13 = sbr.rel (%p11) target = $region8
  $region5: #{fwd.5} parent=0 // loop_body
    %s15 = ssub.s32 %s10, 1
    %s16 = ssub.s32 %s10, 2
    %s26 = sadd.s32 1, %s19
    %p27 = scmp.ge.s32.totalorder %s26, 1
    %s28 = scalar_select %p27, 0, %s26
    %s29 = sadd.s32 1, %s18
    %s30 = scalar_select %p27, %s29, %s18
    %p31 = scmp.ge.s32.totalorder %s30, 2
    %s32 = scalar_select %p31, 0, %s30
    %s33 = sadd.s32 1, %s17
    %s34 = scalar_select %p31, %s33, %s17
    %p35 = scmp.ge.s32.totalorder %s34, 2
    %s36 = scalar_select %p35, 0, %s34
    %s37 = ssub.s32 %s18, %s32
    %s38 = ssub.s32 %s17, %s36
    %s39 = sor.u32 %s37, %s38
    %s40 = ssub.s32 %s19, %s28
    %s41 = sor.u32 %s39, %s40
    %p42 = scmp.eq.s32.totalorder %s41, 0
    %s44 = sadd.s32 %s43, 1
    %s45 = scalar_select %p42, %s43, %s44
    %p48 = pneg %p42
    %p49 = scmp.eq.s32.totalorder %s10, 3
    %p50 = por %p48, %p49
    %p51 = scmp.ne.s32.totalorder %s43, %s46
    %p52 = scmp.eq.s32.totalorder %s10, 0
    %p53 = por %p51, %p52
    %p54 = scmp.ne.s32.totalorder %s43, %s46
    %p55 = scmp.eq.s32.totalorder %s15, 3
    %p56 = por %p54, %p55
    %p57 = scmp.ne.s32.totalorder %s46, %s47
    %p58 = scmp.eq.s32.totalorder %s15, 0
    %p59 = por %p57, %p58
    %p60 = scmp.ne.s32.totalorder %s46, %s47
    %p61 = scmp.eq.s32.totalorder %s16, 3
    %p62 = por %p60, %p61
    %p64 = scmp.ne.s32.totalorder %s47, %s63
    %p65 = scmp.eq.s32.totalorder %s16, 0
    %p66 = por %p64, %p65
    %s67 = sadd.s32 %s19, 1
    %s68 = sadd.s32 %s28, 1
    %s69 = ssub.s32 %s18, %s32
    %s70 = ssub.s32 %s17, %s36
    %s71 = sor.u32 %s69, %s70
    %s72 = ssub.s32 %s67, %s68
    %s73 = sor.u32 %s71, %s72
    %p74 = scmp.eq.s32.totalorder %s73, 0
    %s76 = sadd.s32 %s75, 1
    %s77 = scalar_select %p74, %s75, %s76
    %p80 = pneg %p74
    %p81 = scmp.eq.s32.totalorder %s10, 3
    %p82 = por %p80, %p81
    %p83 = scmp.ne.s32.totalorder %s75, %s78
    %p84 = scmp.eq.s32.totalorder %s10, 0
    %p85 = por %p83, %p84
    %p86 = scmp.ne.s32.totalorder %s75, %s78
    %p87 = scmp.eq.s32.totalorder %s15, 3
    %p88 = por %p86, %p87
    %p89 = scmp.ne.s32.totalorder %s78, %s79
    %p90 = scmp.eq.s32.totalorder %s15, 0
    %p91 = por %p89, %p90
    %p92 = scmp.ne.s32.totalorder %s78, %s79
    %p93 = scmp.eq.s32.totalorder %s16, 3
    %p94 = por %p92, %p93
    %p96 = scmp.ne.s32.totalorder %s79, %s95
    %p97 = scmp.eq.s32.totalorder %s16, 0
    %p98 = por %p96, %p97
    %s99 = ssub.s32 %s17, %s36
    %p100 = scmp.eq.s32.totalorder %s99, 0
    %s102 = sadd.s32 %s101, 1
    %s103 = scalar_select %p100, %s101, %s102
    %p106 = pneg %p100
    %p107 = scmp.eq.s32.totalorder %s10, 3
    %p108 = por %p106, %p107
    %p109 = scmp.ne.s32.totalorder %s101, %s104
    %p110 = scmp.eq.s32.totalorder %s10, 0
    %p111 = por %p109, %p110
    %p112 = scmp.ne.s32.totalorder %s101, %s104
    %p113 = scmp.eq.s32.totalorder %s15, 3
    %p114 = por %p112, %p113
    %p115 = scmp.ne.s32.totalorder %s104, %s105
    %p116 = scmp.eq.s32.totalorder %s15, 0
    %p117 = por %p115, %p116
    %p118 = scmp.ne.s32.totalorder %s104, %s105
    %p119 = scmp.eq.s32.totalorder %s16, 3
    %p120 = por %p118, %p119
    %p122 = scmp.ne.s32.totalorder %s105, %s121
    %p123 = scmp.eq.s32.totalorder %s16, 0
    %p124 = por %p122, %p123
    %s125 = ssub.s32 %s17, %s36
    %p126 = scmp.eq.s32.totalorder %s125, 0
    %s128 = sadd.s32 %s127, 1
    %s129 = scalar_select %p126, %s127, %s128
    %p132 = pneg %p126
    %p133 = scmp.eq.s32.totalorder %s10, 3
    %p134 = por %p132, %p133
    %p135 = scmp.ne.s32.totalorder %s127, %s130
    %p136 = scmp.eq.s32.totalorder %s10, 0
    %p137 = por %p135, %p136
    %p138 = scmp.ne.s32.totalorder %s127, %s130
    %p139 = scmp.eq.s32.totalorder %s15, 3
    %p140 = por %p138, %p139
    %p141 = scmp.ne.s32.totalorder %s130, %s131
    %p142 = scmp.eq.s32.totalorder %s15, 0
    %p143 = por %p141, %p142
    %p144 = scmp.ne.s32.totalorder %s130, %s131
    %p145 = scmp.eq.s32.totalorder %s16, 3
    %p146 = por %p144, %p145
    %p148 = scmp.ne.s32.totalorder %s131, %s147
    %p149 = scmp.eq.s32.totalorder %s16, 0
    %p150 = por %p148, %p149
    %s151 = ssub.s32 %s18, %s32
    %s152 = ssub.s32 %s17, %s36
    %s153 = sor.u32 %s151, %s152
    %s154 = ssub.s32 %s19, %s28
    %s155 = sor.u32 %s153, %s154
    %p156 = scmp.eq.s32.totalorder %s155, 0
    %s158 = sadd.s32 %s157, 1
    %s159 = scalar_select %p156, %s157, %s158
    %p162 = pneg %p156
    %p163 = scmp.eq.s32.totalorder %s10, 3
    %p164 = por %p162, %p163
    %p165 = scmp.ne.s32.totalorder %s157, %s160
    %p166 = scmp.eq.s32.totalorder %s10, 0
    %p167 = por %p165, %p166
    %p168 = scmp.ne.s32.totalorder %s157, %s160
    %p169 = scmp.eq.s32.totalorder %s15, 3
    %p170 = por %p168, %p169
    %p171 = scmp.ne.s32.totalorder %s160, %s161
    %p172 = scmp.eq.s32.totalorder %s15, 0
    %p173 = por %p171, %p172
    %p174 = scmp.ne.s32.totalorder %s160, %s161
    %p175 = scmp.eq.s32.totalorder %s16, 3
    %p176 = por %p174, %p175
    %p178 = scmp.ne.s32.totalorder %s161, %s177
    %p179 = scmp.eq.s32.totalorder %s16, 0
    %p180 = por %p178, %p179
    %p181 = scmp.le.s32.totalorder 1, %s10
    %p182 = scmp.lt.s32.totalorder %s10, 5
    %p183 = pnand %p181, %p182
    %p184 = pneg %p183
    // Predicated region
    $region9: #{fwd.5} parent=5 // pred_check
      _
    $region10: #{fwd.5} parent=5 // pred_check_branch
      %186 = sbr.rel (%p183) target = $region12
    $region11: #{fwd.5} parent=5 // pred_region
      %s187 = ssub.s32 %s10, 1
    $region12: #{fwd.5} parent=5 // pred_fallthru
      _
    %p188 = scmp.lt.s32.totalorder %s10, 4
    // Predicated region
    $region13: #{fwd.5} parent=5 // pred_check
      %p189 = pneg %p188
    $region14: #{fwd.5} parent=5 // pred_check_branch
      %191 = sbr.rel (%p189) target = $region16
    $region15: #{fwd.5} parent=5 // pred_region
      // Predicated region
      $region17: #{fwd.5} parent=15 // pred_check
        %p192 = pneg %p53
      $region18: #{fwd.5} parent=15 // pred_check_branch
        %194 = sbr.rel (%p192) target = $region20
      $region19: #{fwd.5} parent=15 // pred_region
        %p195 = scmp.lt.s32.totalorder %s18, 1
        %s196 = scalar_select %p195, %s18, 1
        %p197 = scmp.lt.s32.totalorder %s17, 1
        %s198 = scalar_select %p197, %s17, 1
        %p199 = scmp.lt.s32.totalorder %s19, 1
        %s200 = scalar_select %p199, %s19, 1
        %s201 = smul.addr %s198, 2
        %s202 = sadd.s32 %s200, %s201
        %s203 = smul.addr %s196, 4
        %s204 = sadd.s32 %s202, %s203
        %s205 = smul.addr %s204, 2
        %s206 = scalar_lea.vmem %s0, %s205
      $region20: #{fwd.5} parent=15 // pred_fallthru
        _
      // Predicated region
      $region21: #{fwd.5} parent=15 // pred_check
        %p207 = pneg %p85
      $region22: #{fwd.5} parent=15 // pred_check_branch
        %209 = sbr.rel (%p207) target = $region24
      $region23: #{fwd.5} parent=15 // pred_region
        %s210 = sadd.s32 %s19, 1
        %p211 = scmp.lt.s32.totalorder %s18, 1
        %s212 = scalar_select %p211, %s18, 1
        %p213 = scmp.lt.s32.totalorder %s17, 1
        %s214 = scalar_select %p213, %s17, 1
        %p215 = scmp.lt.s32.totalorder %s210, 1
        %s216 = scalar_select %p215, %s210, 1
        %s217 = smul.addr %s214, 2
        %s218 = sadd.s32 %s216, %s217
        %s219 = smul.addr %s212, 4
        %s220 = sadd.s32 %s218, %s219
        %s221 = smul.addr %s220, 2
        %s222 = scalar_lea.vmem %s1, %s221
        %s223 = sadd.s32 %s19, 1
      $region24: #{fwd.5} parent=15 // pred_fallthru
        _
      // Predicated region
      $region25: #{fwd.5} parent=15 // pred_check
        %p224 = pneg %p111
      $region26: #{fwd.5} parent=15 // pred_check_branch
        %226 = sbr.rel (%p224) target = $region28
      $region27: #{fwd.5} parent=15 // pred_region
        %p227 = scmp.lt.s32.totalorder %s17, 1
        %s228 = scalar_select %p227, %s17, 1
        %s229 = smul.addr %s228, 2
        %s230 = scalar_lea.vmem %s2, %s229
      $region28: #{fwd.5} parent=15 // pred_fallthru
        _
      // Predicated region
      $region29: #{fwd.5} parent=15 // pred_check
        %p231 = pneg %p137
      $region30: #{fwd.5} parent=15 // pred_check_branch
        %233 = sbr.rel (%p231) target = $region32
      $region31: #{fwd.5} parent=15 // pred_region
        %p234 = scmp.lt.s32.totalorder %s17, 1
        %s235 = scalar_select %p234, %s17, 1
        %s236 = smul.addr %s235, 4
        %s237 = scalar_lea.vmem %s3, %s236
      $region32: #{fwd.5} parent=15 // pred_fallthru
        _
    $region16: #{fwd.5} parent=5 // pred_fallthru
      _
    %p238 = scmp.le.s32.totalorder 1, %s10
    %p239 = scmp.lt.s32.totalorder %s10, 5
    %p240 = pnand %p238, %p239
    %p241 = pneg %p240
    // Predicated region
    $region33: #{fwd.5} parent=5 // pred_check
      _
    $region34: #{fwd.5} parent=5 // pred_check_branch
      %243 = sbr.rel (%p240) target = $region36
    $region35: #{fwd.5} parent=5 // pred_region
      %s244 = ssub.s32 %s10, 1
      %p245 = scmp.lt.s32.totalorder %s21, 1
      %s246 = scalar_select %p245, %s21, 1
      %p247 = scmp.lt.s32.totalorder %s20, 1
      %s248 = scalar_select %p247, %s20, 1
      %p249 = scmp.lt.s32.totalorder %s22, 1
      %s250 = scalar_select %p249, %s22, 1
      %s251 = smul.addr %s248, 2
      %s252 = sadd.s32 %s250, %s251
      %s253 = smul.addr %s246, 4
      %s254 = sadd.s32 %s252, %s253
      %s255 = smul.addr %s254, 2
      %s256 = scalar_lea.vmem %s0, %s255
      %p257 = pneg %p59
      %p258 = pneg %p56
      %s259 = sadd.s32 %s22, 1
      %p260 = scmp.lt.s32.totalorder %s21, 1
      %s261 = scalar_select %p260, %s21, 1
      %p262 = scmp.lt.s32.totalorder %s20, 1
      %s263 = scalar_select %p262, %s20, 1
      %p264 = scmp.lt.s32.totalorder %s259, 1
      %s265 = scalar_select %p264, %s259, 1
      %s266 = smul.addr %s263, 2
      %s267 = sadd.s32 %s265, %s266
      %s268 = smul.addr %s261, 4
      %s269 = sadd.s32 %s267, %s268
      %s270 = smul.addr %s269, 2
      %s271 = scalar_lea.vmem %s1, %s270
      %p272 = pneg %p91
      %p273 = pneg %p88
      %p274 = scmp.lt.s32.totalorder %s20, 1
      %s275 = scalar_select %p274, %s20, 1
      %s276 = smul.addr %s275, 2
      %s277 = scalar_lea.vmem %s2, %s276
      %p278 = pneg %p117
      %p279 = pneg %p114
      %p280 = scmp.lt.s32.totalorder %s20, 1
      %s281 = scalar_select %p280, %s20, 1
      %s282 = smul.addr %s281, 4
      %s283 = scalar_lea.vmem %s3, %s282
      %p284 = pneg %p143
      %p285 = pneg %p140
      %p286 = pneg %p173
      %p287 = pneg %p170
      %p288 = scmp.lt.s32.totalorder %s21, 1
      %s289 = scalar_select %p288, %s21, 1
      %p290 = scmp.lt.s32.totalorder %s20, 1
      %s291 = scalar_select %p290, %s20, 1
      %p292 = scmp.lt.s32.totalorder %s22, 0
      %s293 = scalar_select %p292, %s22, 0
      %s294 = sadd.s32 %s293, %s291
      %s295 = smul.addr %s289, 2
      %s296 = sadd.s32 %s294, %s295
      %s297 = smul.addr %s296, 2
      %s298 = scalar_lea.vmem %s4, %s297
      %p299 = scmp.lt.s32.totalorder %s21, 1
      %s300 = scalar_select %p299, %s21, 1
      %p301 = scmp.lt.s32.totalorder %s20, 1
      %s302 = scalar_select %p301, %s20, 1
      %p303 = scmp.lt.s32.totalorder %s22, 1
      %s304 = scalar_select %p303, %s22, 1
      %s305 = smul.addr %s302, 2
      %s306 = sadd.s32 %s304, %s305
      %s307 = smul.addr %s300, 4
      %s308 = sadd.s32 %s306, %s307
      %s309 = smul.addr %s308, 2
      %s310 = scalar_lea.vmem %s0, %s309
      %s311 = sadd.s32 %s22, 1
      %p312 = scmp.lt.s32.totalorder %s21, 1
      %s313 = scalar_select %p312, %s21, 1
      %p314 = scmp.lt.s32.totalorder %s20, 1
      %s315 = scalar_select %p314, %s20, 1
      %p316 = scmp.lt.s32.totalorder %s311, 1
      %s317 = scalar_select %p316, %s311, 1
      %s318 = smul.addr %s315, 2
      %s319 = sadd.s32 %s317, %s318
      %s320 = smul.addr %s313, 4
      %s321 = sadd.s32 %s319, %s320
      %s322 = smul.addr %s321, 2
      %s323 = scalar_lea.vmem %s1, %s322
      %s324 = sadd.s32 %s22, 1
      %p325 = scmp.lt.s32.totalorder %s20, 1
      %s326 = scalar_select %p325, %s20, 1
      %s327 = smul.addr %s326, 2
      %s328 = scalar_lea.vmem %s2, %s327
      %p329 = scmp.lt.s32.totalorder %s20, 1
      %s330 = scalar_select %p329, %s20, 1
      %s331 = smul.addr %s330, 4
      %s332 = scalar_lea.vmem %s3, %s331
      %p333 = scmp.lt.s32.totalorder %s21, 1
      %s334 = scalar_select %p333, %s21, 1
      %p335 = scmp.lt.s32.totalorder %s20, 1
      %s336 = scalar_select %p335, %s20, 1
      %p337 = scmp.lt.s32.totalorder %s22, 0
      %s338 = scalar_select %p337, %s22, 0
      %s339 = sadd.s32 %s338, %s336
      %s340 = smul.addr %s334, 2
      %s341 = sadd.s32 %s339, %s340
      %s342 = smul.addr %s341, 2
      %s343 = scalar_lea.vmem %s4, %s342
      %v345 = vld [vmem:[%s310] sm:$0x3]
      %v346 = vld [vmem:[%s323] sm:$0x3]
      %v347 = vld [vmem:[%s328] sm:$0x3]
      %v350 = vrot.slane %v345, 6
      %v351 = vrot.slane %v346, 6
      %352 = vrot.lane.b32.xlu0 %v350, 127
      %v353 = vpop.permute.xlu0 %352
      %354 = vrot.lane.b32.xlu0 %v351, 127
      %v355 = vpop.permute.xlu0 %354
      %vm356 = vcmask 1039360
      %v357 = vsel %vm356, %v353, %v355
      %v358 = vrot.slane %v345, 4
      %v359 = vrot.slane %v346, 4
      %360 = vrot.lane.b32.xlu0 %v358, 126
      %v361 = vpop.permute.xlu0 %360
      %362 = vrot.lane.b32.xlu0 %v359, 126
      %v363 = vpop.permute.xlu0 %362
      %vm364 = vcmask 1031168
      %v365 = vsel %vm364, %v361, %v363
      %vm366 = vcmask 1041408
      %v369 = vsel %vm366, %v345, %v357
      %vm370 = vcmask 1043456
      %v372 = vsel %vm370, %v369, %v365
      %v373 = vld [vmem:[%s332] sm:$0xf]
      %375 = vset.pattern.permute.xlu0 0
      %376 = vperm.xlu0 %375, %v373
      %v377 = vpop.permute.xlu0 %376
      %vm379 = vcmask 97280
      %v381 = vsel %vm379, %v347, 0
      %vm383 = vcmask 1045504
      %v384 = vsel %vm383, %v372, 0
      %386 = vmatprep.subr.bf16.mxu0 0
      %387 = vmatpush1.bf16.msra.mxu0 %v384
      %388 = vmatprep.subr.bf16.mxu0 0
      %389 = vmatpush1.bf16.msra.mxu0 0
      %390 = vmatprep.subr.bf16.mxu0 0
      %391 = vmatpush1.bf16.msra.mxu0 0
      %392 = vmatprep.subr.bf16.mxu0 0
      %393 = vmatpush1.bf16.msra.mxu0 0
      %394 = vmatprep.subr.bf16.mxu0 0
      %395 = vmatpush1.bf16.msra.mxu0 0
      %396 = vmatprep.subr.bf16.mxu0 0
      %397 = vmatpush1.bf16.msra.mxu0 0
      %398 = vmatprep.subr.bf16.mxu0 0
      %399 = vmatpush1.bf16.msra.mxu0 0
      %400 = vmatprep.subr.bf16.mxu0 0
      %401 = vmatpush1.bf16.msra.mxu0 0
      %402 = vmatprep.subr.bf16.mxu0 0
      %403 = vmatpush1.bf16.msra.mxu0 0
      %404 = vmatprep.subr.bf16.mxu0 0
      %405 = vmatpush1.bf16.msra.mxu0 0
      %406 = vmatprep.subr.bf16.mxu0 0
      %407 = vmatpush1.bf16.msra.mxu0 0
      %408 = vmatprep.subr.bf16.mxu0 0
      %409 = vmatpush1.bf16.msra.mxu0 0
      %410 = vmatprep.subr.bf16.mxu0 0
      %411 = vmatpush1.bf16.msra.mxu0 0
      %412 = vmatprep.subr.bf16.mxu0 0
      %413 = vmatpush1.bf16.msra.mxu0 0
      %414 = vmatprep.subr.bf16.mxu0 0
      %415 = vmatpush1.bf16.msra.mxu0 0
      %416 = vmatprep.subr.bf16.mxu0 0
      %417 = vmatpush1.bf16.msra.mxu0 0
      %418 = vmatprep.mubr.bf16.mxu0 0
      %419 = vmatmul.mubr.bf16.gmra.mrb[0].mxu0 %v381
      %v420 = vpop.f32.mrb[0].mxu0
      %v421 = vadd.f32 %v377, %v420
      %v422 = vpop.f32.mrb[0].mxu0
      %v423 = vpop.f32.mrb[0].mxu0
      %v424 = vpop.f32.mrb[0].mxu0
      %425 = vdwg.mxu0
      %v426 = vmul.f32 %v421, 0.1
      %v427 = vmax.f32 %v421, %v426
      %s428 = smul.u32 %s22, 128
      %v429 = vlaneseq
      %v430 = vand.u32 %v429, 127
      %v431 = vstv %s428
      %v432 = vadd.s32 %v431, %v430
      %vm433 = vcmp.lt.s32.totalorder %v432, 32
      %v434 = vsel %vm433, 1, 0
      %vm435 = vcmp.eq.s32.totalorder %v434, 1
      %v436 = vsel %vm435, %v427, 0.0
      %v437 = vpack.c.bf16 %v436, %v436
      %438 = vst [vmem:[%s343] sm:$0x3] %v437
      %p439 = scmp.lt.s32.totalorder %s21, 1
      %s440 = scalar_select %p439, %s21, 1
      %p441 = scmp.lt.s32.totalorder %s20, 1
      %s442 = scalar_select %p441, %s20, 1
      %p443 = scmp.lt.s32.totalorder %s22, 0
      %s444 = scalar_select %p443, %s22, 0
      %s445 = sadd.s32 %s444, %s442
      %s446 = smul.addr %s440, 2
      %s447 = sadd.s32 %s445, %s446
      %s448 = smul.addr %s447, 2
      %s449 = scalar_lea.vmem %s4, %s448
      // Predicated region
      $region37: #{fwd.5} parent=35 // pred_check
        %p450 = pneg %p170
      $region38: #{fwd.5} parent=35 // pred_check_branch
        %452 = sbr.rel (%p450) target = $region40
      $region39: #{fwd.5} parent=35 // pred_region
        _
      $region40: #{fwd.5} parent=35 // pred_fallthru
        _
    $region36: #{fwd.5} parent=5 // pred_fallthru
      _
    %p453 = scmp.le.s32.totalorder 2, %s10
    // Predicated region
    $region41: #{fwd.5} parent=5 // pred_check
      %p454 = pneg %p453
    $region42: #{fwd.5} parent=5 // pred_check_branch
      %456 = sbr.rel (%p454) target = $region44
    $region43: #{fwd.5} parent=5 // pred_region
      %s457 = ssub.s32 %s10, 2
      // Predicated region
      $region45: #{fwd.5} parent=43 // pred_check
        %p458 = pneg %p176
      $region46: #{fwd.5} parent=43 // pred_check_branch
        %460 = sbr.rel (%p458) target = $region48
      $region47: #{fwd.5} parent=43 // pred_region
        %p461 = scmp.lt.s32.totalorder %s24, 1
        %s462 = scalar_select %p461, %s24, 1
        %p463 = scmp.lt.s32.totalorder %s23, 1
        %s464 = scalar_select %p463, %s23, 1
        %p465 = scmp.lt.s32.totalorder %s25, 0
        %s466 = scalar_select %p465, %s25, 0
        %s467 = sadd.s32 %s466, %s464
        %s468 = smul.addr %s462, 2
        %s469 = sadd.s32 %s467, %s468
        %s470 = smul.addr %s469, 2
        %s471 = scalar_lea.vmem %s4, %s470
      $region48: #{fwd.5} parent=43 // pred_fallthru
        _
    $region44: #{fwd.5} parent=5 // pred_fallthru
      _
  $region6: #{fwd.5} parent=0 // loop_footer
    %s14 = sadd.s32 1, %s10
  $region7: #{fwd.5} parent=0 // loop_footer_branch
    %9 = sbr.rel target = $region3
  $region8: #{fwd.5} parent=0 // loop_exit
    _

// kernel: fwd.7
$region0: #{fwd.7}
  #allocation0 [shape = 'u32[]', space=smem, size = 0x4, offset = 0x4, fixed_abs, tag = 'smem constant byte address 0x4 - core index']
  #allocation1 [shape = 'u32[144,128]{1,0:T(1,128)}', space=vmem, size = 0x12000, scoped, tag = 'internal scratch']
  #allocation2 [shape = 'f32[1,1,1]{2,1,0:T(1,128)S(1)}', space=vmem, size = 0x200, scoped, tag = 'scoped memory for fwd.7']
  %s0 = inlined_call_operand.vmem [shape: bf16[2,1,8,256], index: 0, kind: input, shape index: {}, may-alias: {0,1}]
  %s1 = inlined_call_operand.vmem [shape: bf16[2,1,8,256], index: 1, kind: input, shape index: {}, may-alias: {0,1}]
  %s2 = inlined_call_operand.vmem [shape: bf16[1,1,1,24], index: 2, kind: input, shape index: {}]
  %s3 = inlined_call_operand.<no memory space> [shape: f32[1,1,1], index: 3, kind: input, shape index: {}]
  %s4 = inlined_call_operand.vmem [shape: f32[2,1,1,128], index: 4, kind: output, shape index: {}]
  %s5 = sld [smem:[#allocation0]]
  $region49: #{fwd.7} parent=0
    _
  %s7 = ssub.s32 1, %s5
  %s8 = scalar_select 0, %s7, %s5
  %v9 = vstv %s3
  %10 = vst [vmem:[#allocation2] sm:$0x1] %v9
  loop: start=0, step=1, limit=4
  $region2: #{fwd.7} parent=0 // loop_pre_header
    _
  $region3: #{fwd.7} parent=0 // loop_header
    %s12 = sphi 0, %s16
    %p13 = scmp.ge.s32.totalorder %s12, 4
    %s19 = sphi 0, %s38
    %s20 = sphi 0, %s34
    %s21 = sphi 0, %s30
    %s22 = sphi 0, %s19
    %s23 = sphi 0, %s20
    %s24 = sphi 0, %s21
    %s25 = sphi 0, %s22
    %s26 = sphi 0, %s23
    %s27 = sphi 0, %s24
    %s45 = sphi 0, %s47
    %s48 = sphi 0, %s45
    %s49 = sphi 0, %s48
    %s65 = sphi 0, %s49
    %s77 = sphi 0, %s79
    %s80 = sphi 0, %s77
    %s81 = sphi 0, %s80
    %s97 = sphi 0, %s81
    %s103 = sphi 0, %s105
    %s106 = sphi 0, %s103
    %s107 = sphi 0, %s106
    %s123 = sphi 0, %s107
    %s129 = sphi 0, %s131
    %s132 = sphi 0, %s129
    %s133 = sphi 0, %s132
    %s149 = sphi 0, %s133
    %s159 = sphi 0, %s161
    %s162 = sphi 0, %s159
    %s163 = sphi 0, %s162
    %s179 = sphi 0, %s163
  $region4: #{fwd.7} parent=0 // loop_header_branch
    %15 = sbr.rel (%p13) target = $region8
  $region5: #{fwd.7} parent=0 // loop_body
    %s17 = ssub.s32 %s12, 1
    %s18 = ssub.s32 %s12, 2
    %s28 = sadd.s32 1, %s21
    %p29 = scmp.ge.s32.totalorder %s28, 1
    %s30 = scalar_select %p29, 0, %s28
    %s31 = sadd.s32 1, %s20
    %s32 = scalar_select %p29, %s31, %s20
    %p33 = scmp.ge.s32.totalorder %s32, 2
    %s34 = scalar_select %p33, 0, %s32
    %s35 = sadd.s32 1, %s19
    %s36 = scalar_select %p33, %s35, %s19
    %p37 = scmp.ge.s32.totalorder %s36, 1
    %s38 = scalar_select %p37, 0, %s36
    %s39 = ssub.s32 %s20, %s34
    %s40 = ssub.s32 %s19, %s38
    %s41 = sor.u32 %s39, %s40
    %s42 = ssub.s32 %s21, %s30
    %s43 = sor.u32 %s41, %s42
    %p44 = scmp.eq.s32.totalorder %s43, 0
    %s46 = sadd.s32 %s45, 1
    %s47 = scalar_select %p44, %s45, %s46
    %p50 = pneg %p44
    %p51 = scmp.eq.s32.totalorder %s12, 1
    %p52 = por %p50, %p51
    %p53 = scmp.ne.s32.totalorder %s45, %s48
    %p54 = scmp.eq.s32.totalorder %s12, 0
    %p55 = por %p53, %p54
    %p56 = scmp.ne.s32.totalorder %s45, %s48
    %p57 = scmp.eq.s32.totalorder %s17, 1
    %p58 = por %p56, %p57
    %p59 = scmp.ne.s32.totalorder %s48, %s49
    %p60 = scmp.eq.s32.totalorder %s17, 0
    %p61 = por %p59, %p60
    %p62 = scmp.ne.s32.totalorder %s48, %s49
    %p63 = scmp.eq.s32.totalorder %s18, 1
    %p64 = por %p62, %p63
    %p66 = scmp.ne.s32.totalorder %s49, %s65
    %p67 = scmp.eq.s32.totalorder %s18, 0
    %p68 = por %p66, %p67
    %s69 = sadd.s32 %s21, 1
    %s70 = sadd.s32 %s30, 1
    %s71 = ssub.s32 %s20, %s34
    %s72 = ssub.s32 %s19, %s38
    %s73 = sor.u32 %s71, %s72
    %s74 = ssub.s32 %s69, %s70
    %s75 = sor.u32 %s73, %s74
    %p76 = scmp.eq.s32.totalorder %s75, 0
    %s78 = sadd.s32 %s77, 1
    %s79 = scalar_select %p76, %s77, %s78
    %p82 = pneg %p76
    %p83 = scmp.eq.s32.totalorder %s12, 1
    %p84 = por %p82, %p83
    %p85 = scmp.ne.s32.totalorder %s77, %s80
    %p86 = scmp.eq.s32.totalorder %s12, 0
    %p87 = por %p85, %p86
    %p88 = scmp.ne.s32.totalorder %s77, %s80
    %p89 = scmp.eq.s32.totalorder %s17, 1
    %p90 = por %p88, %p89
    %p91 = scmp.ne.s32.totalorder %s80, %s81
    %p92 = scmp.eq.s32.totalorder %s17, 0
    %p93 = por %p91, %p92
    %p94 = scmp.ne.s32.totalorder %s80, %s81
    %p95 = scmp.eq.s32.totalorder %s18, 1
    %p96 = por %p94, %p95
    %p98 = scmp.ne.s32.totalorder %s81, %s97
    %p99 = scmp.eq.s32.totalorder %s18, 0
    %p100 = por %p98, %p99
    %s101 = ssub.s32 %s19, %s38
    %p102 = scmp.eq.s32.totalorder %s101, 0
    %s104 = sadd.s32 %s103, 1
    %s105 = scalar_select %p102, %s103, %s104
    %p108 = pneg %p102
    %p109 = scmp.eq.s32.totalorder %s12, 1
    %p110 = por %p108, %p109
    %p111 = scmp.ne.s32.totalorder %s103, %s106
    %p112 = scmp.eq.s32.totalorder %s12, 0
    %p113 = por %p111, %p112
    %p114 = scmp.ne.s32.totalorder %s103, %s106
    %p115 = scmp.eq.s32.totalorder %s17, 1
    %p116 = por %p114, %p115
    %p117 = scmp.ne.s32.totalorder %s106, %s107
    %p118 = scmp.eq.s32.totalorder %s17, 0
    %p119 = por %p117, %p118
    %p120 = scmp.ne.s32.totalorder %s106, %s107
    %p121 = scmp.eq.s32.totalorder %s18, 1
    %p122 = por %p120, %p121
    %p124 = scmp.ne.s32.totalorder %s107, %s123
    %p125 = scmp.eq.s32.totalorder %s18, 0
    %p126 = por %p124, %p125
    %s127 = ssub.s32 %s19, %s38
    %p128 = scmp.eq.s32.totalorder %s127, 0
    %s130 = sadd.s32 %s129, 1
    %s131 = scalar_select %p128, %s129, %s130
    %p134 = pneg %p128
    %p135 = scmp.eq.s32.totalorder %s12, 1
    %p136 = por %p134, %p135
    %p137 = scmp.ne.s32.totalorder %s129, %s132
    %p138 = scmp.eq.s32.totalorder %s12, 0
    %p139 = por %p137, %p138
    %p140 = scmp.ne.s32.totalorder %s129, %s132
    %p141 = scmp.eq.s32.totalorder %s17, 1
    %p142 = por %p140, %p141
    %p143 = scmp.ne.s32.totalorder %s132, %s133
    %p144 = scmp.eq.s32.totalorder %s17, 0
    %p145 = por %p143, %p144
    %p146 = scmp.ne.s32.totalorder %s132, %s133
    %p147 = scmp.eq.s32.totalorder %s18, 1
    %p148 = por %p146, %p147
    %p150 = scmp.ne.s32.totalorder %s133, %s149
    %p151 = scmp.eq.s32.totalorder %s18, 0
    %p152 = por %p150, %p151
    %s153 = ssub.s32 %s20, %s34
    %s154 = ssub.s32 %s19, %s38
    %s155 = sor.u32 %s153, %s154
    %s156 = ssub.s32 %s21, %s30
    %s157 = sor.u32 %s155, %s156
    %p158 = scmp.eq.s32.totalorder %s157, 0
    %s160 = sadd.s32 %s159, 1
    %s161 = scalar_select %p158, %s159, %s160
    %p164 = pneg %p158
    %p165 = scmp.eq.s32.totalorder %s12, 1
    %p166 = por %p164, %p165
    %p167 = scmp.ne.s32.totalorder %s159, %s162
    %p168 = scmp.eq.s32.totalorder %s12, 0
    %p169 = por %p167, %p168
    %p170 = scmp.ne.s32.totalorder %s159, %s162
    %p171 = scmp.eq.s32.totalorder %s17, 1
    %p172 = por %p170, %p171
    %p173 = scmp.ne.s32.totalorder %s162, %s163
    %p174 = scmp.eq.s32.totalorder %s17, 0
    %p175 = por %p173, %p174
    %p176 = scmp.ne.s32.totalorder %s162, %s163
    %p177 = scmp.eq.s32.totalorder %s18, 1
    %p178 = por %p176, %p177
    %p180 = scmp.ne.s32.totalorder %s163, %s179
    %p181 = scmp.eq.s32.totalorder %s18, 0
    %p182 = por %p180, %p181
    %p183 = scmp.le.s32.totalorder 1, %s12
    %p184 = scmp.lt.s32.totalorder %s12, 3
    %p185 = pnand %p183, %p184
    %p186 = pneg %p185
    // Predicated region
    $region9: #{fwd.7} parent=5 // pred_check
      _
    $region10: #{fwd.7} parent=5 // pred_check_branch
      %188 = sbr.rel (%p185) target = $region12
    $region11: #{fwd.7} parent=5 // pred_region
      %s189 = ssub.s32 %s12, 1
      // Predicated region
      $region13: #{fwd.7} parent=11 // pred_check
        %p190 = pneg %p119
      $region14: #{fwd.7} parent=11 // pred_check_branch
        %192 = sbr.rel (%p190) target = $region16
      $region15: #{fwd.7} parent=11 // pred_region
        %p193 = scmp.lt.s32.totalorder %s22, 0
        %s194 = scalar_select %p193, %s22, 0
        %s195 = scalar_lea.vmem %s2, %s194
      $region16: #{fwd.7} parent=11 // pred_fallthru
        _
      // Predicated region
      $region17: #{fwd.7} parent=11 // pred_check
        %p196 = pneg %p145
      $region18: #{fwd.7} parent=11 // pred_check_branch
        %198 = sbr.rel (%p196) target = $region20
      $region19: #{fwd.7} parent=11 // pred_region
        %p199 = scmp.lt.s32.totalorder %s22, 0
        %s200 = scalar_select %p199, %s22, 0
        %s201 = scalar_lea.vmem [#allocation2], %s200
      $region20: #{fwd.7} parent=11 // pred_fallthru
        _
    $region12: #{fwd.7} parent=5 // pred_fallthru
      _
    %p202 = scmp.lt.s32.totalorder %s12, 2
    // Predicated region
    $region21: #{fwd.7} parent=5 // pred_check
      %p203 = pneg %p202
    $region22: #{fwd.7} parent=5 // pred_check_branch
      %205 = sbr.rel (%p203) target = $region24
    $region23: #{fwd.7} parent=5 // pred_region
      // Predicated region
      $region25: #{fwd.7} parent=23 // pred_check
        %p206 = pneg %p55
      $region26: #{fwd.7} parent=23 // pred_check_branch
        %208 = sbr.rel (%p206) target = $region28
      $region27: #{fwd.7} parent=23 // pred_region
        %p209 = scmp.lt.s32.totalorder %s20, 1
        %s210 = scalar_select %p209, %s20, 1
        %p211 = scmp.lt.s32.totalorder %s19, 0
        %s212 = scalar_select %p211, %s19, 0
        %p213 = scmp.lt.s32.totalorder %s21, 1
        %s214 = scalar_select %p213, %s21, 1
        %s215 = smul.addr %s212, 2
        %s216 = sadd.s32 %s214, %s215
        %s217 = smul.addr %s210, 2
        %s218 = sadd.s32 %s216, %s217
        %s219 = smul.addr %s218, 4
        %s220 = scalar_lea.vmem %s0, %s219
      $region28: #{fwd.7} parent=23 // pred_fallthru
        _
      // Predicated region
      $region29: #{fwd.7} parent=23 // pred_check
        %p221 = pneg %p87
      $region30: #{fwd.7} parent=23 // pred_check_branch
        %223 = sbr.rel (%p221) target = $region32
      $region31: #{fwd.7} parent=23 // pred_region
        %s224 = sadd.s32 %s21, 1
        %p225 = scmp.lt.s32.totalorder %s20, 1
        %s226 = scalar_select %p225, %s20, 1
        %p227 = scmp.lt.s32.totalorder %s19, 0
        %s228 = scalar_select %p227, %s19, 0
        %p229 = scmp.lt.s32.totalorder %s224, 1
        %s230 = scalar_select %p229, %s224, 1
        %s231 = smul.addr %s228, 2
        %s232 = sadd.s32 %s230, %s231
        %s233 = smul.addr %s226, 2
        %s234 = sadd.s32 %s232, %s233
        %s235 = smul.addr %s234, 4
        %s236 = scalar_lea.vmem %s1, %s235
        %s237 = sadd.s32 %s21, 1
      $region32: #{fwd.7} parent=23 // pred_fallthru
        _
    $region24: #{fwd.7} parent=5 // pred_fallthru
      _
    %p238 = scmp.le.s32.totalorder 1, %s12
    %p239 = scmp.lt.s32.totalorder %s12, 3
    %p240 = pnand %p238, %p239
    %p241 = pneg %p240
    // Predicated region
    $region33: #{fwd.7} parent=5 // pred_check
      _
    $region34: #{fwd.7} parent=5 // pred_check_branch
      %243 = sbr.rel (%p240) target = $region36
    $region35: #{fwd.7} parent=5 // pred_region
      %s244 = ssub.s32 %s12, 1
      %p245 = scmp.lt.s32.totalorder %s23, 1
      %s246 = scalar_select %p245, %s23, 1
      %p247 = scmp.lt.s32.totalorder %s22, 0
      %s248 = scalar_select %p247, %s22, 0
      %p249 = scmp.lt.s32.totalorder %s24, 1
      %s250 = scalar_select %p249, %s24, 1
      %s251 = smul.addr %s248, 2
      %s252 = sadd.s32 %s250, %s251
      %s253 = smul.addr %s246, 2
      %s254 = sadd.s32 %s252, %s253
      %s255 = smul.addr %s254, 4
      %s256 = scalar_lea.vmem %s0, %s255
      %p257 = pneg %p61
      %p258 = pneg %p58
      %s259 = sadd.s32 %s24, 1
      %p260 = scmp.lt.s32.totalorder %s23, 1
      %s261 = scalar_select %p260, %s23, 1
      %p262 = scmp.lt.s32.totalorder %s22, 0
      %s263 = scalar_select %p262, %s22, 0
      %p264 = scmp.lt.s32.totalorder %s259, 1
      %s265 = scalar_select %p264, %s259, 1
      %s266 = smul.addr %s263, 2
      %s267 = sadd.s32 %s265, %s266
      %s268 = smul.addr %s261, 2
      %s269 = sadd.s32 %s267, %s268
      %s270 = smul.addr %s269, 4
      %s271 = scalar_lea.vmem %s1, %s270
      %p272 = pneg %p93
      %p273 = pneg %p90
      %p274 = scmp.lt.s32.totalorder %s22, 0
      %s275 = scalar_select %p274, %s22, 0
      %s276 = scalar_lea.vmem %s2, %s275
      %p277 = pneg %p119
      %p278 = pneg %p116
      %p279 = scmp.lt.s32.totalorder %s22, 0
      %s280 = scalar_select %p279, %s22, 0
      %s281 = scalar_lea.vmem [#allocation2], %s280
      %p282 = pneg %p145
      %p283 = pneg %p142
      %p284 = pneg %p175
      %p285 = pneg %p172
      %p286 = scmp.lt.s32.totalorder %s23, 1
      %s287 = scalar_select %p286, %s23, 1
      %p288 = scmp.lt.s32.totalorder %s22, 0
      %s289 = scalar_select %p288, %s22, 0
      %p290 = scmp.lt.s32.totalorder %s24, 0
      %s291 = scalar_select %p290, %s24, 0
      %s292 = sadd.s32 %s291, %s289
      %s293 = sadd.s32 %s292, %s287
      %s294 = scalar_lea.vmem %s4, %s293
      %p295 = scmp.lt.s32.totalorder %s23, 1
      %s296 = scalar_select %p295, %s23, 1
      %p297 = scmp.lt.s32.totalorder %s22, 0
      %s298 = scalar_select %p297, %s22, 0
      %p299 = scmp.lt.s32.totalorder %s24, 1
      %s300 = scalar_select %p299, %s24, 1
      %s301 = smul.addr %s298, 2
      %s302 = sadd.s32 %s300, %s301
      %s303 = smul.addr %s296, 2
      %s304 = sadd.s32 %s302, %s303
      %s305 = smul.addr %s304, 4
      %s306 = scalar_lea.vmem %s0, %s305
      %s307 = sadd.s32 %s24, 1
      %p308 = scmp.lt.s32.totalorder %s23, 1
      %s309 = scalar_select %p308, %s23, 1
      %p310 = scmp.lt.s32.totalorder %s22, 0
      %s311 = scalar_select %p310, %s22, 0
      %p312 = scmp.lt.s32.totalorder %s307, 1
      %s313 = scalar_select %p312, %s307, 1
      %s314 = smul.addr %s311, 2
      %s315 = sadd.s32 %s313, %s314
      %s316 = smul.addr %s309, 2
      %s317 = sadd.s32 %s315, %s316
      %s318 = smul.addr %s317, 4
      %s319 = scalar_lea.vmem %s1, %s318
      %s320 = sadd.s32 %s24, 1
      %p321 = scmp.lt.s32.totalorder %s22, 0
      %s322 = scalar_select %p321, %s22, 0
      %s323 = scalar_lea.vmem %s2, %s322
      %p324 = scmp.lt.s32.totalorder %s22, 0
      %s325 = scalar_select %p324, %s22, 0
      %s326 = scalar_lea.vmem [#allocation2], %s325
      %p327 = scmp.lt.s32.totalorder %s23, 1
      %s328 = scalar_select %p327, %s23, 1
      %p329 = scmp.lt.s32.totalorder %s22, 0
      %s330 = scalar_select %p329, %s22, 0
      %p331 = scmp.lt.s32.totalorder %s24, 0
      %s332 = scalar_select %p331, %s24, 0
      %s333 = sadd.s32 %s332, %s330
      %s334 = sadd.s32 %s333, %s328
      %s335 = scalar_lea.vmem %s4, %s334
      %v337 = vld [vmem:[%s306] sm:$0xf]
      %v338 = vld [vmem:[%s319] sm:$0xf]
      %v339 = vld [vmem:[%s323] sm:$0x1]
      %v342 = vrot.slane %v337, 4
      %v343 = vrot.slane %v338, 4
      %344 = vrot.lane.b32.xlu0 %v342, 127
      %v345 = vpop.permute.xlu0 %344
      %346 = vrot.lane.b32.xlu0 %v343, 127
      %v347 = vpop.permute.xlu0 %346
      %vm348 = vcmask 1039360
      %v349 = vsel %vm348, %v345, %v347
      %350 = vrot.lane.b32.xlu0 %v337, 126
      %v351 = vpop.permute.xlu0 %350
      %352 = vrot.lane.b32.xlu0 %v338, 126
      %v353 = vpop.permute.xlu0 %352
      %vm354 = vcmask 1031168
      %v355 = vsel %vm354, %v351, %v353
      %vm356 = vcmask 1043456
      %v359 = vsel %vm356, %v337, %v349
      %v361 = vld [vmem:[%s326] sm:$0x1]
      %363 = vset.pattern.permute.xlu0 0
      %364 = vperm.xlu0 %363, %v361
      %v365 = vpop.permute.xlu0 %364
      %v367 = vlaneseq
      %v368 = vshrl.u32 %v367, 7
      %v369 = vsub.s32 0, %v368
      %v370 = vrot.slane %v365, %v369
      %vm371 = vcmask 195584
      %v373 = vsel %vm371, %v339, 0
      %v376 = vsel %vm356, %v355, 0
      %378 = vmatprep.subr.bf16.mxu0 0
      %379 = vmatpush1.bf16.msra.mxu0 %v359
      %380 = vmatprep.subr.bf16.mxu0 0
      %381 = vmatpush1.bf16.msra.mxu0 %v376
      %382 = vmatprep.subr.bf16.mxu0 0
      %383 = vmatpush1.bf16.msra.mxu0 0
      %384 = vmatprep.subr.bf16.mxu0 0
      %385 = vmatpush1.bf16.msra.mxu0 0
      %386 = vmatprep.subr.bf16.mxu0 0
      %387 = vmatpush1.bf16.msra.mxu0 0
      %388 = vmatprep.subr.bf16.mxu0 0
      %389 = vmatpush1.bf16.msra.mxu0 0
      %390 = vmatprep.subr.bf16.mxu0 0
      %391 = vmatpush1.bf16.msra.mxu0 0
      %392 = vmatprep.subr.bf16.mxu0 0
      %393 = vmatpush1.bf16.msra.mxu0 0
      %394 = vmatprep.subr.bf16.mxu0 0
      %395 = vmatpush1.bf16.msra.mxu0 0
      %396 = vmatprep.subr.bf16.mxu0 0
      %397 = vmatpush1.bf16.msra.mxu0 0
      %398 = vmatprep.subr.bf16.mxu0 0
      %399 = vmatpush1.bf16.msra.mxu0 0
      %400 = vmatprep.subr.bf16.mxu0 0
      %401 = vmatpush1.bf16.msra.mxu0 0
      %402 = vmatprep.subr.bf16.mxu0 0
      %403 = vmatpush1.bf16.msra.mxu0 0
      %404 = vmatprep.subr.bf16.mxu0 0
      %405 = vmatpush1.bf16.msra.mxu0 0
      %406 = vmatprep.subr.bf16.mxu0 0
      %407 = vmatpush1.bf16.msra.mxu0 0
      %408 = vmatprep.subr.bf16.mxu0 0
      %409 = vmatpush1.bf16.msra.mxu0 0
      %410 = vmatprep.mubr.bf16.mxu0 0
      %411 = vmatmul.mubr.bf16.gmra.mrb[0].mxu0 %v373
      %v412 = vpop.f32.mrb[0].mxu0
      %v413 = vadd.f32 %v370, %v412
      %v414 = vpop.f32.mrb[0].mxu0
      %v415 = vpop.f32.mrb[0].mxu0
      %v416 = vpop.f32.mrb[0].mxu0
      %417 = vdwg.mxu0
      %s418 = smul.u32 %s24, 128
      %v419 = vlaneseq
      %v420 = vand.u32 %v419, 127
      %v421 = vstv %s418
      %v422 = vadd.s32 %v421, %v420
      %vm423 = vcmp.lt.s32.totalorder %v422, 32
      %v424 = vsel %vm423, %v413, 0.0
      %425 = vst [vmem:[%s335] sm:$0x1] %v424
      %p426 = scmp.lt.s32.totalorder %s23, 1
      %s427 = scalar_select %p426, %s23, 1
      %p428 = scmp.lt.s32.totalorder %s22, 0
      %s429 = scalar_select %p428, %s22, 0
      %p430 = scmp.lt.s32.totalorder %s24, 0
      %s431 = scalar_select %p430, %s24, 0
      %s432 = sadd.s32 %s431, %s429
      %s433 = sadd.s32 %s432, %s427
      %s434 = scalar_lea.vmem %s4, %s433
      // Predicated region
      $region37: #{fwd.7} parent=35 // pred_check
        %p435 = pneg %p172
      $region38: #{fwd.7} parent=35 // pred_check_branch
        %437 = sbr.rel (%p435) target = $region40
      $region39: #{fwd.7} parent=35 // pred_region
        _
      $region40: #{fwd.7} parent=35 // pred_fallthru
        _
    $region36: #{fwd.7} parent=5 // pred_fallthru
      _
    %p438 = scmp.le.s32.totalorder 2, %s12
    // Predicated region
    $region41: #{fwd.7} parent=5 // pred_check
      %p439 = pneg %p438
    $region42: #{fwd.7} parent=5 // pred_check_branch
      %441 = sbr.rel (%p439) target = $region44
    $region43: #{fwd.7} parent=5 // pred_region
      %s442 = ssub.s32 %s12, 2
      // Predicated region
      $region45: #{fwd.7} parent=43 // pred_check
        %p443 = pneg %p178
      $region46: #{fwd.7} parent=43 // pred_check_branch
        %445 = sbr.rel (%p443) target = $region48
      $region47: #{fwd.7} parent=43 // pred_region
        %p446 = scmp.lt.s32.totalorder %s26, 1
        %s447 = scalar_select %p446, %s26, 1
        %p448 = scmp.lt.s32.totalorder %s25, 0
        %s449 = scalar_select %p448, %s25, 0
        %p450 = scmp.lt.s32.totalorder %s27, 0
        %s451 = scalar_select %p450, %s27, 0
        %s452 = sadd.s32 %s451, %s449
        %s453 = sadd.s32 %s452, %s447
        %s454 = scalar_lea.vmem %s4, %s453
      $region48: #{fwd.7} parent=43 // pred_fallthru
        _
    $region44: #{fwd.7} parent=5 // pred_fallthru
      _
  $region6: #{fwd.7} parent=0 // loop_footer
    %s16 = sadd.s32 1, %s12
  $region7: #{fwd.7} parent=0 // loop_footer_branch
    %11 = sbr.rel target = $region3
  $region8: #{fwd.7} parent=0 // loop_exit
    _

</llo_original>
